<compile_context>
chip_gen: v6e
topology: v6e:2x2x1
jax: 0.10.0
libtpu: 0.0.40
codegen_flags: <defaults>
</compile_context>

<pallas_src>
import functools

import numpy as np
import jax
import jax.numpy as jnp
from jax.experimental import pallas as pl
from jax.experimental.pallas import tpu as pltpu

POOL_SIZES = (1, 2, 4, 6)
N_LEVELS = len(POOL_SIZES)

_LEVEL_SIZES = tuple(s * s for s in POOL_SIZES)            # (1, 4, 16, 36)
_cum = np.concatenate([[0], np.cumsum(_LEVEL_SIZES)])
_LEVEL_OFFSETS = tuple(int(v) for v in _cum[:-1])          # (0, 1, 5, 21)
TOTAL_CELLS = int(_cum[-1])                                # 57
PACK = 128                                                 # one lane tile
assert TOTAL_CELLS <= PACK


# ----------------------------------------------------------------------------
# Host-side construction of the linear operators (numpy, deterministic).
# ----------------------------------------------------------------------------
def adaptive_avg_pool_matrix(out_size, in_size):
    """M (out_size, in_size) s.t. pooled = M @ signal   (AdaptiveAvgPool1d)."""
    m = np.zeros((out_size, in_size), dtype=np.float32)
    for i in range(out_size):
        start = (i * in_size) // out_size
        end = -((-(i + 1) * in_size) // out_size)          # ceil((i+1)*in/out)
        m[i, start:end] = 1.0 / float(end - start)
    return m


def bilinear_upsample_matrix(out_size, in_size):
    """M (out_size, in_size): PyTorch bilinear, align_corners=False."""
    m = np.zeros((out_size, in_size), dtype=np.float32)
    scale = in_size / out_size
    for o in range(out_size):
        src = (o + 0.5) * scale - 0.5
        if src < 0.0:
            src = 0.0
        i0 = min(int(np.floor(src)), in_size - 1)
        i1 = min(i0 + 1, in_size - 1)
        w1 = src - i0
        w0 = 1.0 - w1
        m[o, i0] += w0
        m[o, i1] += w1
    return m


def build_pool_operator(H, W, hw_pad):
    """P (hw_pad, PACK): columns [off_l : off_l+s_l^2] hold level-l's adaptive
    avg-pool weights; rows >= H*W and columns >= 57 are exactly zero."""
    HW = H * W
    P = np.zeros((hw_pad, PACK), dtype=np.float32)
    for l, s in enumerate(POOL_SIZES):
        off = _LEVEL_OFFSETS[l]
        p2 = np.kron(adaptive_avg_pool_matrix(s, H),
                     adaptive_avg_pool_matrix(s, W))        # (s*s, HW)
        P[:HW, off:off + s * s] = p2.T
    return P


def build_upsample_operator(H, W, hw_pad):
    """U (PACK, hw_pad): rows [off_l : off_l+s_l^2] hold level-l's bilinear
    upsample weights; columns >= H*W and rows >= 57 are exactly zero."""
    HW = H * W
    U = np.zeros((PACK, hw_pad), dtype=np.float32)
    for l, s in enumerate(POOL_SIZES):
        off = _LEVEL_OFFSETS[l]
        u2 = np.kron(bilinear_upsample_matrix(H, s),
                     bilinear_upsample_matrix(W, s))        # (HW, s*s)
        U[off:off + s * s, :HW] = u2.T
    return U


def fold_params(params, eps=1e-5):
    """Fold per-level 1x1 Conv + BatchNorm (inference) into stacked affine:
    A (4*C_out, C_in) bf16 and b (4*C_out, 1) f32, so y_l = A[l-block] @ x + b."""
    A_rows, b_rows = [], []
    for l in range(N_LEVELS):
        scale = params["bn_gamma"][l] / jnp.sqrt(params["bn_var"][l] + eps)
        A_rows.append(params["conv_w"][l] * scale[:, None])            # (C_out, C_in)
        b_rows.append(scale * (params["conv_b"][l] - params["bn_mean"][l])
                      + params["bn_beta"][l])                          # (C_out,)
    A = jnp.concatenate(A_rows, axis=0).astype(jnp.bfloat16)           # (4*C_out, C_in)
    b = jnp.concatenate(b_rows, axis=0)[:, None].astype(jnp.float32)   # (4*C_out, 1)
    return A, b


# ----------------------------------------------------------------------------
# Tiling / VMEM budgeting (all static Python ints, per-generation capacity).
# ----------------------------------------------------------------------------
def _tpu_vmem_capacity():
    try:
        cap = int(pltpu.get_tpu_info().vmem_capacity_bytes)
        if cap > 0:
            return cap
    except Exception:
        pass
    return 64 << 20                                        # conservative (v7x per-core)


def _round_up(v, m):
    return -(-v // m) * m


def _choose_hw_tile(per_col_bytes, fixed_bytes, budget_bytes, HW):
    """Largest lane-dense (multiple-of-128) spatial tile fitting the budget."""
    avail = max(budget_bytes - fixed_bytes, 2 << 20)
    tile = (avail // max(per_col_bytes, 1)) // 128 * 128
    tile = max(128, min(int(tile), 16384))
    return int(min(tile, _round_up(HW, 128)))


def _vmem_limit(block_bytes, capacity):
    need = int(block_bytes) + (8 << 20)                    # blocks + slack
    return int(min(max(need, 32 << 20), capacity - (2 << 20)))


# ----------------------------------------------------------------------------
# Pallas kernels.
# ----------------------------------------------------------------------------
def _pool_kernel(HW, hw_tile, x_ref, p_ref, pooled_ref):
    """Stage 1: fused adaptive-avg-pool of all four levels, reduction over the
    spatial tiles.  Accumulates (in f32) directly into the resident output
    block (1, cb, PACK)."""
    t = pl.program_id(2)

    @pl.when(t == 0)
    def _():
        pooled_ref[...] = jnp.zeros_like(pooled_ref)

    x = x_ref[0]                                           # (cb, hw_tile) f32
    if HW % hw_tile:                                       # static: ragged boundary tile
        limit = HW - t * hw_tile
        col = jax.lax.broadcasted_iota(jnp.int32, x.shape, 1)
        x = jnp.where(col < limit, x, 0.0)                 # zero garbage columns
    pooled_ref[0] += jnp.dot(x.astype(jnp.bfloat16), p_ref[...],
                             preferred_element_type=jnp.float32)


def _conv_bn_relu_kernel(c_out, pooled_ref, a_ref, b_ref, y_ref):
    """Stage 2: folded 1x1-conv/BN (+bias) + ReLU + block-diagonal level mask
    on the packed pooled grid.  Tiny: one grid step per image."""
    pooled = pooled_ref[0].astype(jnp.bfloat16)            # (C_in, PACK)
    y = jnp.dot(a_ref[...], pooled, preferred_element_type=jnp.float32)
    y = jnp.maximum(y + b_ref[...], 0.0)                   # bias (f32) + ReLU

    # Block-diagonal level selector built in-kernel (no resident mask operand):
    # keep (row-level == column-level) and drop the 57..127 padding columns.
    rows = jax.lax.broadcasted_iota(jnp.int32, y.shape, 0)
    cols = jax.lax.broadcasted_iota(jnp.int32, y.shape, 1)
    row_level = jnp.zeros_like(rows)
    col_level = jnp.zeros_like(cols)
    for l in range(1, N_LEVELS):
        row_level = row_level + (rows >= l * c_out).astype(jnp.int32)
        col_level = col_level + (cols >= _LEVEL_OFFSETS[l]).astype(jnp.int32)
    keep = (row_level == col_level) & (cols < TOTAL_CELLS)
    y_ref[0] = jnp.where(keep, y, 0.0).astype(y_ref.dtype)


def _upsample_concat_kernel(r4, y_ref, u_ref, x_ref, o_ref):
    """Stage 3: fused bilinear upsample of all four levels + identity concat,
    written directly into static slices of the lane-dense output block."""
    up = jnp.dot(y_ref[0], u_ref[...], preferred_element_type=jnp.float32)
    o_ref[0, 0:r4, :] = up.astype(o_ref.dtype)             # [x1; x2; x3; x4]
    o_ref[0, r4:, :] = x_ref[0]                            # identity x (exact f32)


# ----------------------------------------------------------------------------
# Wrapper.
# ----------------------------------------------------------------------------
def pyramid_pooling(x, params):
    """x: (N, C_in, H, W) float32 NCHW. params: per-level conv/bn params."""
    N, C_in, H, W = x.shape
    HW = H * W
    C_out = params["conv_w"][0].shape[0]
    R4 = N_LEVELS * C_out
    C_total = R4 + C_in

    capacity = _tpu_vmem_capacity()
    budget = min(int(0.6 * capacity), capacity - (16 << 20))

    # Channel blocking for stage 1 (parallel work for v7x's 2nd core; smaller
    # per-step blocks everywhere).  Pool rows are channel-independent, so
    # ragged last channel blocks are harmless (their writes are masked off).
    cb = C_in if C_in <= 512 else 512
    CB = pl.cdiv(C_in, cb)

    # Per-stage spatial tiles (decoupled budgets).
    per_col1 = 2 * cb * 4 + 2 * PACK * 2                   # x f32 + P bf16 (dbuf)
    fixed1 = 2 * cb * PACK * 4                             # pooled accumulator block
    hw1 = _choose_hw_tile(per_col1, fixed1, budget, HW)
    T1 = pl.cdiv(HW, hw1)

    per_col2 = 2 * PACK * 2 + 2 * C_in * 4 + 2 * C_total * 4   # U + identity x + out
    fixed2 = 2 * R4 * PACK * 2                                  # y block
    hw2 = _choose_hw_tile(per_col2, fixed2, budget, HW)
    T2 = pl.cdiv(HW, hw2)

    # Operators are tiny and host-built: zero-pad them (not x) to tile multiples.
    P = jnp.asarray(build_pool_operator(H, W, T1 * hw1), jnp.bfloat16)      # (HWp1, PACK)
    U = jnp.asarray(build_upsample_operator(H, W, T2 * hw2), jnp.bfloat16)  # (PACK, HWp2)
    A, b = fold_params(params)                                              # bf16 / f32

    # Free view of x — no HBM copy; identity concat branch stays exact f32.
    xf = x.reshape(N, C_in, HW)

    # Stage 1: packed adaptive-avg-pool (reduction over spatial tiles).
    blk1 = 2 * (cb * hw1 * 4 + hw1 * PACK * 2 + cb * PACK * 4)
    pooled = pl.pallas_call(
        functools.partial(_pool_kernel, HW, hw1),
        out_shape=jax.ShapeDtypeStruct((N, C_in, PACK), jnp.float32),
        grid=(N, CB, T1),
        in_specs=[
            pl.BlockSpec((1, cb, hw1), lambda n, c, t: (n, c, t)),
            pl.BlockSpec((hw1, PACK), lambda n, c, t: (t, 0)),
        ],
        out_specs=pl.BlockSpec((1, cb, PACK), lambda n, c, t: (n, c, 0)),
        compiler_params=pltpu.CompilerParams(
            dimension_semantics=("parallel", "parallel", "arbitrary"),
            vmem_limit_bytes=_vmem_limit(blk1, capacity)),
    )(xf, P)

    # Stage 2: folded conv/BN + ReLU + level mask on the tiny pooled grid.
    blk15 = 2 * (C_in * PACK * 4 + R4 * C_in * 2 + R4 * PACK * 4 + R4 * PACK * 2)
    y = pl.pallas_call(
        functools.partial(_conv_bn_relu_kernel, C_out),
        out_shape=jax.ShapeDtypeStruct((N, R4, PACK), jnp.bfloat16),
        grid=(N,),
        in_specs=[
            pl.BlockSpec((1, C_in, PACK), lambda n: (n, 0, 0)),
            pl.BlockSpec((R4, C_in), lambda n: (0, 0)),
            pl.BlockSpec((R4, 1), lambda n: (0, 0)),
        ],
        out_specs=pl.BlockSpec((1, R4, PACK), lambda n: (n, 0, 0)),
        compiler_params=pltpu.CompilerParams(
            dimension_semantics=("parallel",),
            vmem_limit_bytes=_vmem_limit(blk15, capacity)),
    )(pooled, A, b)

    # Stage 3: upsample all levels + identity concat, unpadded lane-dense output
    # (Pallas masks the ragged final store).
    blk2 = 2 * (R4 * PACK * 2 + PACK * hw2 * 2 + C_in * hw2 * 4 + C_total * hw2 * 4)
    out = pl.pallas_call(
        functools.partial(_upsample_concat_kernel, R4),
        out_shape=jax.ShapeDtypeStruct((N, C_total, HW), jnp.float32),
        grid=(N, T2),
        in_specs=[
            pl.BlockSpec((1, R4, PACK), lambda n, t: (n, 0, 0)),
            pl.BlockSpec((PACK, hw2), lambda n, t: (0, t)),
            pl.BlockSpec((1, C_in, hw2), lambda n, t: (n, 0, t)),
        ],
        out_specs=pl.BlockSpec((1, C_total, hw2), lambda n, t: (n, 0, t)),
        compiler_params=pltpu.CompilerParams(
            dimension_semantics=("parallel", "parallel"),
            vmem_limit_bytes=_vmem_limit(blk2, capacity)),
    )(y, U, xf)

    return out.reshape(N, C_total, H, W)


# ----------------------------------------------------------------------------
# Pure-JAX f32 reference (same math, un-fused) for a loose correctness check.
# ----------------------------------------------------------------------------
def pyramid_pooling_reference(x, params, eps=1e-5):
    N, C_in, H, W = x.shape
    outs = []
    for l, s in enumerate(POOL_SIZES):
        ph = jnp.asarray(adaptive_avg_pool_matrix(s, H))
        pw = jnp.asarray(adaptive_avg_pool_matrix(s, W))
        uh = jnp.asarray(bilinear_upsample_matrix(H, s))
        uw = jnp.asarray(bilinear_upsample_matrix(W, s))
        pooled = jnp.einsum('ih,jw,nchw->ncij', ph, pw, x)
        scale = params["bn_gamma"][l] / jnp.sqrt(params["bn_var"][l] + eps)
        A = params["conv_w"][l] * scale[:, None]
        b = scale * (params["conv_b"][l] - params["bn_mean"][l]) + params["bn_beta"][l]
        y = jnp.einsum('oc,ncij->noij', A, pooled) + b[None, :, None, None]
        y = jnp.maximum(y, 0.0)
        outs.append(jnp.einsum('hi,wj,noij->nohw', uh, uw, y))
    outs.append(x)
    return jnp.concatenate(outs, axis=1)


# ----------------------------------------------------------------------------
# Deterministic parameter init (shapes from PCBR.__init__ / PyramidPooling).
# ----------------------------------------------------------------------------
def init_params(key, c_in, c_out):
    keys = jax.random.split(key, 4 * N_LEVELS)
    conv_w, conv_b, gamma, beta, mean, var = [], [], [], [], [], []
    for l in range(N_LEVELS):
        k0, k1, k2, k3 = keys[4 * l: 4 * l + 4]
        conv_w.append(0.1 * jax.random.normal(k0, (c_out, c_in), jnp.float32))
        conv_b.append(0.1 * jax.random.normal(k1, (c_out,), jnp.float32))
        gamma.append(1.0 + 0.1 * jax.random.normal(k2, (c_out,), jnp.float32))
        beta.append(0.1 * jax.random.normal(k3, (c_out,), jnp.float32))
        mean.append(jnp.zeros((c_out,), jnp.float32))
        var.append(jnp.ones((c_out,), jnp.float32))
    return {"conv_w": conv_w, "conv_b": conv_b,
            "bn_gamma": gamma, "bn_beta": beta,
            "bn_mean": mean, "bn_var": var}


if __name__ == "__main__":
    key = jax.random.PRNGKey(0)
    k_x, k_p = jax.random.split(key)

    N, C_in, C_out, H, W = 2, 4, 4, 16, 16
    x = jax.random.normal(k_x, (N, C_in, H, W), jnp.float32)
    params = init_params(k_p, C_in, C_out)

    out = jax.jit(pyramid_pooling)(x, params)
    out = jax.block_until_ready(out)

    expected_channels = N_LEVELS * C_out + C_in              # 4*4 + 4 = 20
    assert out.shape == (N, expected_channels, H, W), out.shape
    assert bool(jnp.all(jnp.isfinite(out)))

    # Loose tolerance: kernel runs the pool/conv/upsample matmuls in bf16
    # (accumulation and bias/ReLU epilogue in f32; identity branch exact).
    ref = pyramid_pooling_reference(x, params)
    assert bool(jnp.allclose(out, ref, atol=5e-2, rtol=5e-2))

    print("KERNEL_OK")
</pallas_src>

<mosaic_0001>
module attributes {stable_mosaic.version = 11 : i64} {
  func.func @_pool_kernel(%arg0: i32, %arg1: i32, %arg2: i32, %arg3: memref<1x4x256xf32, #tpu.memory_space<vmem>>, %arg4: memref<256x128xbf16, #tpu.memory_space<vmem>>, %arg5: memref<1x4x128xf32, #tpu.memory_space<vmem>>) attributes {dimension_semantics = [#tpu.dimension_semantics<parallel>, #tpu.dimension_semantics<parallel>, #tpu.dimension_semantics<arbitrary>], iteration_bounds = array<i64: 2, 1, 1>, scalar_prefetch = 0 : i64, scratch_operands = 0 : i64, tpu.core_type = #tpu.core_type<tc>, window_params = [{transform_indices = @transform_0, window_bounds = array<i64: 1, 4, 256>}, {transform_indices = @transform_1, window_bounds = array<i64: 256, 128>}, {transform_indices = @transform_2, window_bounds = array<i64: 1, 4, 128>}]} {
    %c0_i32 = arith.constant 0 : i32
    %0 = arith.cmpi eq, %arg2, %c0_i32 : i32
    %1 = arith.extui %0 : i1 to i32
    %c0_i32_0 = arith.constant 0 : i32
    %2 = arith.cmpi ne, %1, %c0_i32_0 : i32
    scf.if %2 {
      %cst_11 = arith.constant 0.000000e+00 : f32
      %14 = vector.broadcast %cst_11 : f32 to vector<1x4x128xf32>
      %c0_12 = arith.constant 0 : index
      %c0_13 = arith.constant 0 : index
      %c0_14 = arith.constant 0 : index
      %15 = vector.load %arg5[%c0_12, %c0_13, %c0_14] : memref<1x4x128xf32, #tpu.memory_space<vmem>>, vector<1x4x128xf32>
      tpu.vector_store %arg5[%c0_12, %c0_13, %c0_14], %14 {strides = array<i32>} : memref<1x4x128xf32, #tpu.memory_space<vmem>>, vector<1x4x128xf32>,
    } else {
    }
    %c0 = arith.constant 0 : index
    %c0_1 = arith.constant 0 : index
    %c0_2 = arith.constant 0 : index
    %3 = vector.load %arg3[%c0, %c0_1, %c0_2] : memref<1x4x256xf32, #tpu.memory_space<vmem>>, vector<1x4x256xf32>
    %4 = vector.shape_cast %3 : vector<1x4x256xf32> to vector<4x256xf32>
    %c0_3 = arith.constant 0 : index
    %c0_4 = arith.constant 0 : index
    %c0_5 = arith.constant 0 : index
    %5 = vector.load %arg5[%c0_3, %c0_4, %c0_5] : memref<1x4x128xf32, #tpu.memory_space<vmem>>, vector<1x4x128xf32>
    %6 = vector.shape_cast %5 : vector<1x4x128xf32> to vector<4x128xf32>
    %7 = arith.truncf %4 : vector<4x256xf32> to vector<4x256xbf16>
    %c0_6 = arith.constant 0 : index
    %c0_7 = arith.constant 0 : index
    %8 = vector.load %arg4[%c0_6, %c0_7] : memref<256x128xbf16, #tpu.memory_space<vmem>>, vector<256x128xbf16>
    %cst = arith.constant dense<0.000000e+00> : vector<4x128xf32>
    %9 = tpu.matmul %7, %8, %cst {dimension_numbers = #tpu.dot_dimension_numbers<[1], [0], [0], [1], [0, 0, 1, 1], [], []>} : vector<4x256xbf16>, vector<256x128xbf16>, vector<4x128xf32> -> vector<4x128xf32>
    %10 = arith.addf %6, %9 : vector<4x128xf32>
    %c0_8 = arith.constant 0 : index
    %c0_9 = arith.constant 0 : index
    %c0_10 = arith.constant 0 : index
    %11 = vector.load %arg5[%c0_8, %c0_9, %c0_10] : memref<1x4x128xf32, #tpu.memory_space<vmem>>, vector<1x4x128xf32>
    %12 = vector.shape_cast %11 : vector<1x4x128xf32> to vector<4x128xf32>
    %13 = vector.shape_cast %10 : vector<4x128xf32> to vector<1x4x128xf32>
    tpu.vector_store %arg5[%c0_8, %c0_9, %c0_10], %13 {strides = array<i32>} : memref<1x4x128xf32, #tpu.memory_space<vmem>>, vector<1x4x128xf32>,
    return
  }
  func.func @transform_0(%arg0: i32, %arg1: i32, %arg2: i32) -> (i32, i32, i32) {
    %c0_i32 = arith.constant 0 : i32
    return %arg0, %arg1, %arg2 : i32, i32, i32
  }
  func.func @transform_1(%arg0: i32, %arg1: i32, %arg2: i32) -> (i32, i32) {
    %c0_i32 = arith.constant 0 : i32
    %c0_i32_0 = arith.constant 0 : i32
    return %arg2, %c0_i32 : i32, i32
  }
  func.func @transform_2(%arg0: i32, %arg1: i32, %arg2: i32) -> (i32, i32, i32) {
    %c0_i32 = arith.constant 0 : i32
    %c0_i32_0 = arith.constant 0 : i32
    return %arg0, %arg1, %c0_i32 : i32, i32, i32
  }
}

module attributes {stable_mosaic.version = 11 : i64} {
  func.func @_conv_bn_relu_kernel(%arg0: i32, %arg1: memref<1x4x128xf32, #tpu.memory_space<vmem>>, %arg2: memref<16x4xbf16, #tpu.memory_space<vmem>>, %arg3: memref<16x1xf32, #tpu.memory_space<vmem>>, %arg4: memref<1x16x128xbf16, #tpu.memory_space<vmem>>) attributes {dimension_semantics = [#tpu.dimension_semantics<parallel>], iteration_bounds = array<i64: 2>, scalar_prefetch = 0 : i64, scratch_operands = 0 : i64, tpu.core_type = #tpu.core_type<tc>, window_params = [{transform_indices = @transform_0, window_bounds = array<i64: 1, 4, 128>}, {pipeline_mode = #tpu.pipeline_mode<synchronous>, transform_indices = @transform_1, window_bounds = array<i64: 16, 4>}, {pipeline_mode = #tpu.pipeline_mode<synchronous>, transform_indices = @transform_2, window_bounds = array<i64: 16, 1>}, {transform_indices = @transform_3, window_bounds = array<i64: 1, 16, 128>}]} {
    %c0 = arith.constant 0 : index
    %c0_0 = arith.constant 0 : index
    %c0_1 = arith.constant 0 : index
    %0 = vector.load %arg1[%c0, %c0_0, %c0_1] : memref<1x4x128xf32, #tpu.memory_space<vmem>>, vector<1x4x128xf32>
    %1 = vector.shape_cast %0 : vector<1x4x128xf32> to vector<4x128xf32>
    %2 = arith.truncf %1 : vector<4x128xf32> to vector<4x128xbf16>
    %c0_2 = arith.constant 0 : index
    %c0_3 = arith.constant 0 : index
    %3 = vector.load %arg2[%c0_2, %c0_3] : memref<16x4xbf16, #tpu.memory_space<vmem>>, vector<16x4xbf16>
    %cst = arith.constant dense<0.000000e+00> : vector<16x128xf32>
    %4 = tpu.matmul %3, %2, %cst {dimension_numbers = #tpu.dot_dimension_numbers<[1], [0], [0], [1], [0, 0, 1, 1], [], []>} : vector<16x4xbf16>, vector<4x128xbf16>, vector<16x128xf32> -> vector<16x128xf32>
    %c0_4 = arith.constant 0 : index
    %c0_5 = arith.constant 0 : index
    %5 = vector.load %arg3[%c0_4, %c0_5] : memref<16x1xf32, #tpu.memory_space<vmem>>, vector<16x1xf32>
    %6 = vector.broadcast %5 : vector<16x1xf32> to vector<16x128xf32>
    %7 = arith.addf %4, %6 : vector<16x128xf32>
    %cst_6 = arith.constant 0.000000e+00 : f32
    %8 = vector.broadcast %cst_6 : f32 to vector<16x128xf32>
    %9 = arith.maximumf %7, %8 : vector<16x128xf32>
    %10 = tpu.iota {dimensions = array<i32: 0>} : vector<16x128xi32>
    %11 = tpu.iota {dimensions = array<i32: 1>} : vector<16x128xi32>
    %c0_i32 = arith.constant 0 : i32
    %12 = vector.broadcast %c0_i32 : i32 to vector<16x128xi32>
    %c0_i32_7 = arith.constant 0 : i32
    %13 = vector.broadcast %c0_i32_7 : i32 to vector<16x128xi32>
    %c4_i32 = arith.constant 4 : i32
    %14 = vector.broadcast %c4_i32 : i32 to vector<16x128xi32>
    %15 = arith.cmpi sge, %10, %14 : vector<16x128xi32>
    %16 = arith.extui %15 : vector<16x128xi1> to vector<16x128xi32>
    %17 = arith.addi %12, %16 : vector<16x128xi32>
    %c1_i32 = arith.constant 1 : i32
    %18 = vector.broadcast %c1_i32 : i32 to vector<16x128xi32>
    %19 = arith.cmpi sge, %11, %18 : vector<16x128xi32>
    %20 = arith.extui %19 : vector<16x128xi1> to vector<16x128xi32>
    %21 = arith.addi %13, %20 : vector<16x128xi32>
    %c8_i32 = arith.constant 8 : i32
    %22 = vector.broadcast %c8_i32 : i32 to vector<16x128xi32>
    %23 = arith.cmpi sge, %10, %22 : vector<16x128xi32>
    %24 = arith.extui %23 : vector<16x128xi1> to vector<16x128xi32>
    %25 = arith.addi %17, %24 : vector<16x128xi32>
    %c5_i32 = arith.constant 5 : i32
    %26 = vector.broadcast %c5_i32 : i32 to vector<16x128xi32>
    %27 = arith.cmpi sge, %11, %26 : vector<16x128xi32>
    %28 = arith.extui %27 : vector<16x128xi1> to vector<16x128xi32>
    %29 = arith.addi %21, %28 : vector<16x128xi32>
    %c12_i32 = arith.constant 12 : i32
    %30 = vector.broadcast %c12_i32 : i32 to vector<16x128xi32>
    %31 = arith.cmpi sge, %10, %30 : vector<16x128xi32>
    %32 = arith.extui %31 : vector<16x128xi1> to vector<16x128xi32>
    %33 = arith.addi %25, %32 : vector<16x128xi32>
    %c21_i32 = arith.constant 21 : i32
    %34 = vector.broadcast %c21_i32 : i32 to vector<16x128xi32>
    %35 = arith.cmpi sge, %11, %34 : vector<16x128xi32>
    %36 = arith.extui %35 : vector<16x128xi1> to vector<16x128xi32>
    %37 = arith.addi %29, %36 : vector<16x128xi32>
    %38 = arith.cmpi eq, %33, %37 : vector<16x128xi32>
    %c57_i32 = arith.constant 57 : i32
    %39 = vector.broadcast %c57_i32 : i32 to vector<16x128xi32>
    %40 = arith.cmpi slt, %11, %39 : vector<16x128xi32>
    %41 = arith.andi %38, %40 : vector<16x128xi1>
    %cst_8 = arith.constant 0.000000e+00 : f32
    %42 = vector.broadcast %cst_8 : f32 to vector<16x128xf32>
    %43 = arith.select %41, %9, %42 : vector<16x128xi1>, vector<16x128xf32>
    %44 = arith.truncf %43 : vector<16x128xf32> to vector<16x128xbf16>
    %c0_9 = arith.constant 0 : index
    %c0_10 = arith.constant 0 : index
    %c0_11 = arith.constant 0 : index
    %45 = vector.load %arg4[%c0_9, %c0_10, %c0_11] : memref<1x16x128xbf16, #tpu.memory_space<vmem>>, vector<1x16x128xbf16>
    %46 = vector.shape_cast %45 : vector<1x16x128xbf16> to vector<16x128xbf16>
    %47 = vector.shape_cast %44 : vector<16x128xbf16> to vector<1x16x128xbf16>
    tpu.vector_store %arg4[%c0_9, %c0_10, %c0_11], %47 {strides = array<i32>} : memref<1x16x128xbf16, #tpu.memory_space<vmem>>, vector<1x16x128xbf16>,
    return
  }
  func.func @transform_0(%arg0: i32) -> (i32, i32, i32) {
    %c0_i32 = arith.constant 0 : i32
    %c0_i32_0 = arith.constant 0 : i32
    %c0_i32_1 = arith.constant 0 : i32
    return %arg0, %c0_i32, %c0_i32_0 : i32, i32, i32
  }
  func.func @transform_1(%arg0: i32) -> (i32, i32) {
    %c0_i32 = arith.constant 0 : i32
    %c0_i32_0 = arith.constant 0 : i32
    %c0_i32_1 = arith.constant 0 : i32
    return %c0_i32, %c0_i32_0 : i32, i32
  }
  func.func @transform_2(%arg0: i32) -> (i32, i32) {
    %c0_i32 = arith.constant 0 : i32
    %c0_i32_0 = arith.constant 0 : i32
    %c0_i32_1 = arith.constant 0 : i32
    return %c0_i32, %c0_i32_0 : i32, i32
  }
  func.func @transform_3(%arg0: i32) -> (i32, i32, i32) {
    %c0_i32 = arith.constant 0 : i32
    %c0_i32_0 = arith.constant 0 : i32
    %c0_i32_1 = arith.constant 0 : i32
    return %arg0, %c0_i32, %c0_i32_0 : i32, i32, i32
  }
}

module attributes {stable_mosaic.version = 11 : i64} {
  func.func @_upsample_concat_kernel(%arg0: i32, %arg1: i32, %arg2: memref<1x16x128xbf16, #tpu.memory_space<vmem>>, %arg3: memref<128x256xbf16, #tpu.memory_space<vmem>>, %arg4: memref<1x4x256xf32, #tpu.memory_space<vmem>>, %arg5: memref<1x20x256xf32, #tpu.memory_space<vmem>>) attributes {dimension_semantics = [#tpu.dimension_semantics<parallel>, #tpu.dimension_semantics<parallel>], iteration_bounds = array<i64: 2, 1>, scalar_prefetch = 0 : i64, scratch_operands = 0 : i64, tpu.core_type = #tpu.core_type<tc>, window_params = [{transform_indices = @transform_0, window_bounds = array<i64: 1, 16, 128>}, {transform_indices = @transform_1, window_bounds = array<i64: 128, 256>}, {transform_indices = @transform_2, window_bounds = array<i64: 1, 4, 256>}, {transform_indices = @transform_3, window_bounds = array<i64: 1, 20, 256>}]} {
    %c0 = arith.constant 0 : index
    %c0_0 = arith.constant 0 : index
    %c0_1 = arith.constant 0 : index
    %0 = vector.load %arg2[%c0, %c0_0, %c0_1] : memref<1x16x128xbf16, #tpu.memory_space<vmem>>, vector<1x16x128xbf16>
    %1 = vector.shape_cast %0 : vector<1x16x128xbf16> to vector<16x128xbf16>
    %c0_2 = arith.constant 0 : index
    %c0_3 = arith.constant 0 : index
    %2 = vector.load %arg3[%c0_2, %c0_3] : memref<128x256xbf16, #tpu.memory_space<vmem>>, vector<128x256xbf16>
    %cst = arith.constant dense<0.000000e+00> : vector<16x256xf32>
    %3 = tpu.matmul %1, %2, %cst {dimension_numbers = #tpu.dot_dimension_numbers<[1], [0], [0], [1], [0, 0, 1, 1], [], []>} : vector<16x128xbf16>, vector<128x256xbf16>, vector<16x256xf32> -> vector<16x256xf32>
    %c0_4 = arith.constant 0 : index
    %c0_5 = arith.constant 0 : index
    %c0_6 = arith.constant 0 : index
    %4 = vector.load %arg5[%c0_4, %c0_5, %c0_6] : memref<1x20x256xf32, #tpu.memory_space<vmem>>, vector<1x16x256xf32>
    %5 = vector.shape_cast %4 : vector<1x16x256xf32> to vector<16x256xf32>
    %6 = vector.shape_cast %3 : vector<16x256xf32> to vector<1x16x256xf32>
    tpu.vector_store %arg5[%c0_4, %c0_5, %c0_6], %6 {strides = array<i32>} : memref<1x20x256xf32, #tpu.memory_space<vmem>>, vector<1x16x256xf32>,
    %c0_7 = arith.constant 0 : index
    %c0_8 = arith.constant 0 : index
    %c0_9 = arith.constant 0 : index
    %7 = vector.load %arg4[%c0_7, %c0_8, %c0_9] : memref<1x4x256xf32, #tpu.memory_space<vmem>>, vector<1x4x256xf32>
    %8 = vector.shape_cast %7 : vector<1x4x256xf32> to vector<4x256xf32>
    %c0_10 = arith.constant 0 : index
    %c16 = arith.constant 16 : index
    %c0_11 = arith.constant 0 : index
    %9 = vector.load %arg5[%c0_10, %c16, %c0_11] : memref<1x20x256xf32, #tpu.memory_space<vmem>>, vector<1x4x256xf32>
    %10 = vector.shape_cast %9 : vector<1x4x256xf32> to vector<4x256xf32>
    %11 = vector.shape_cast %8 : vector<4x256xf32> to vector<1x4x256xf32>
    tpu.vector_store %arg5[%c0_10, %c16, %c0_11], %11 {strides = array<i32>} : memref<1x20x256xf32, #tpu.memory_space<vmem>>, vector<1x4x256xf32>,
    return
  }
  func.func @transform_0(%arg0: i32, %arg1: i32) -> (i32, i32, i32) {
    %c0_i32 = arith.constant 0 : i32
    %c0_i32_0 = arith.constant 0 : i32
    %c0_i32_1 = arith.constant 0 : i32
    return %arg0, %c0_i32, %c0_i32_0 : i32, i32, i32
  }
  func.func @transform_1(%arg0: i32, %arg1: i32) -> (i32, i32) {
    %c0_i32 = arith.constant 0 : i32
    %c0_i32_0 = arith.constant 0 : i32
    return %c0_i32, %arg1 : i32, i32
  }
  func.func @transform_2(%arg0: i32, %arg1: i32) -> (i32, i32, i32) {
    %c0_i32 = arith.constant 0 : i32
    %c0_i32_0 = arith.constant 0 : i32
    return %arg0, %c0_i32, %arg1 : i32, i32, i32
  }
  func.func @transform_3(%arg0: i32, %arg1: i32) -> (i32, i32, i32) {
    %c0_i32 = arith.constant 0 : i32
    %c0_i32_0 = arith.constant 0 : i32
    return %arg0, %c0_i32, %arg1 : i32, i32, i32
  }
}

</mosaic_0001>

<llo_original>
// kernel: pyramid_pooling.3
$region0: #{pyramid_pooling.3}
  #allocation0 [shape = 'u32[]', space=smem, size = 0x4, offset = 0x4, fixed_abs, tag = 'smem constant byte address 0x4 - core index']
  #allocation1 [shape = 'u32[144,128]{1,0:T(1,128)}', space=vmem, size = 0x12000, scoped, tag = 'internal scratch']
  %s0 = inlined_call_operand.vmem [shape: f32[2,4,256], index: 0, kind: input, shape index: {}]
  %s1 = inlined_call_operand.vmem [shape: bf16[256,128], index: 1, kind: input, shape index: {}]
  %s2 = inlined_call_operand.vmem [shape: f32[2,4,128], index: 2, kind: output, shape index: {}]
  %s3 = sld [smem:[#allocation0]]
  $region45: #{pyramid_pooling.3} parent=0
    _
  %s5 = ssub.s32 1, %s3
  %s6 = scalar_select 0, %s5, %s3
  loop: start=0, step=1, limit=4
  $region2: #{pyramid_pooling.3} parent=0 // loop_pre_header
    _
  $region3: #{pyramid_pooling.3} parent=0 // loop_header
    %s8 = sphi 0, %s12
    %p9 = scmp.ge.s32.totalorder %s8, 4
    %s15 = sphi 0, %s34
    %s16 = sphi 0, %s30
    %s17 = sphi 0, %s26
    %s18 = sphi 0, %s15
    %s19 = sphi 0, %s16
    %s20 = sphi 0, %s17
    %s21 = sphi 0, %s18
    %s22 = sphi 0, %s19
    %s23 = sphi 0, %s20
    %s41 = sphi 0, %s43
    %s44 = sphi 0, %s41
    %s45 = sphi 0, %s44
    %s61 = sphi 0, %s45
    %s67 = sphi 0, %s69
    %s70 = sphi 0, %s67
    %s71 = sphi 0, %s70
    %s87 = sphi 0, %s71
    %s95 = sphi 0, %s97
    %s98 = sphi 0, %s95
    %s99 = sphi 0, %s98
    %s115 = sphi 0, %s99
  $region4: #{pyramid_pooling.3} parent=0 // loop_header_branch
    %11 = sbr.rel (%p9) target = $region8
  $region5: #{pyramid_pooling.3} parent=0 // loop_body
    %s13 = ssub.s32 %s8, 1
    %s14 = ssub.s32 %s8, 2
    %s24 = sadd.s32 1, %s17
    %p25 = scmp.ge.s32.totalorder %s24, 1
    %s26 = scalar_select %p25, 0, %s24
    %s27 = sadd.s32 1, %s16
    %s28 = scalar_select %p25, %s27, %s16
    %p29 = scmp.ge.s32.totalorder %s28, 1
    %s30 = scalar_select %p29, 0, %s28
    %s31 = sadd.s32 1, %s15
    %s32 = scalar_select %p29, %s31, %s15
    %p33 = scmp.ge.s32.totalorder %s32, 2
    %s34 = scalar_select %p33, 0, %s32
    %s35 = ssub.s32 %s15, %s34
    %s36 = ssub.s32 %s16, %s30
    %s37 = sor.u32 %s35, %s36
    %s38 = ssub.s32 %s17, %s26
    %s39 = sor.u32 %s37, %s38
    %p40 = scmp.eq.s32.totalorder %s39, 0
    %s42 = sadd.s32 %s41, 1
    %s43 = scalar_select %p40, %s41, %s42
    %p46 = pneg %p40
    %p47 = scmp.eq.s32.totalorder %s8, 1
    %p48 = por %p46, %p47
    %p49 = scmp.ne.s32.totalorder %s41, %s44
    %p50 = scmp.eq.s32.totalorder %s8, 0
    %p51 = por %p49, %p50
    %p52 = scmp.ne.s32.totalorder %s41, %s44
    %p53 = scmp.eq.s32.totalorder %s13, 1
    %p54 = por %p52, %p53
    %p55 = scmp.ne.s32.totalorder %s44, %s45
    %p56 = scmp.eq.s32.totalorder %s13, 0
    %p57 = por %p55, %p56
    %p58 = scmp.ne.s32.totalorder %s44, %s45
    %p59 = scmp.eq.s32.totalorder %s14, 1
    %p60 = por %p58, %p59
    %p62 = scmp.ne.s32.totalorder %s45, %s61
    %p63 = scmp.eq.s32.totalorder %s14, 0
    %p64 = por %p62, %p63
    %s65 = ssub.s32 %s17, %s26
    %p66 = scmp.eq.s32.totalorder %s65, 0
    %s68 = sadd.s32 %s67, 1
    %s69 = scalar_select %p66, %s67, %s68
    %p72 = pneg %p66
    %p73 = scmp.eq.s32.totalorder %s8, 1
    %p74 = por %p72, %p73
    %p75 = scmp.ne.s32.totalorder %s67, %s70
    %p76 = scmp.eq.s32.totalorder %s8, 0
    %p77 = por %p75, %p76
    %p78 = scmp.ne.s32.totalorder %s67, %s70
    %p79 = scmp.eq.s32.totalorder %s13, 1
    %p80 = por %p78, %p79
    %p81 = scmp.ne.s32.totalorder %s70, %s71
    %p82 = scmp.eq.s32.totalorder %s13, 0
    %p83 = por %p81, %p82
    %p84 = scmp.ne.s32.totalorder %s70, %s71
    %p85 = scmp.eq.s32.totalorder %s14, 1
    %p86 = por %p84, %p85
    %p88 = scmp.ne.s32.totalorder %s71, %s87
    %p89 = scmp.eq.s32.totalorder %s14, 0
    %p90 = por %p88, %p89
    %s91 = ssub.s32 %s15, %s34
    %s92 = ssub.s32 %s16, %s30
    %s93 = sor.u32 %s91, %s92
    %p94 = scmp.eq.s32.totalorder %s93, 0
    %s96 = sadd.s32 %s95, 1
    %s97 = scalar_select %p94, %s95, %s96
    %p100 = pneg %p94
    %p101 = scmp.eq.s32.totalorder %s8, 1
    %p102 = por %p100, %p101
    %p103 = scmp.ne.s32.totalorder %s95, %s98
    %p104 = scmp.eq.s32.totalorder %s8, 0
    %p105 = por %p103, %p104
    %p106 = scmp.ne.s32.totalorder %s95, %s98
    %p107 = scmp.eq.s32.totalorder %s13, 1
    %p108 = por %p106, %p107
    %p109 = scmp.ne.s32.totalorder %s98, %s99
    %p110 = scmp.eq.s32.totalorder %s13, 0
    %p111 = por %p109, %p110
    %p112 = scmp.ne.s32.totalorder %s98, %s99
    %p113 = scmp.eq.s32.totalorder %s14, 1
    %p114 = por %p112, %p113
    %p116 = scmp.ne.s32.totalorder %s99, %s115
    %p117 = scmp.eq.s32.totalorder %s14, 0
    %p118 = por %p116, %p117
    %p119 = scmp.le.s32.totalorder 1, %s8
    %p120 = scmp.lt.s32.totalorder %s8, 3
    %p121 = pnand %p119, %p120
    %p122 = pneg %p121
    // Predicated region
    $region9: #{pyramid_pooling.3} parent=5 // pred_check
      _
    $region10: #{pyramid_pooling.3} parent=5 // pred_check_branch
      %124 = sbr.rel (%p121) target = $region12
    $region11: #{pyramid_pooling.3} parent=5 // pred_region
      %s125 = ssub.s32 %s8, 1
      // Predicated region
      $region13: #{pyramid_pooling.3} parent=11 // pred_check
        %p126 = pneg %p83
      $region14: #{pyramid_pooling.3} parent=11 // pred_check_branch
        %128 = sbr.rel (%p126) target = $region16
      $region15: #{pyramid_pooling.3} parent=11 // pred_region
        %s129 = smul.u32 32, %s20
        %p130 = scmp.lt.s32.totalorder %s129, 31
        %s131 = scalar_select %p130, %s129, 31
        %s132 = smul.addr %s131, 4
        %s133 = scalar_lea.vmem %s1, %s132
        %s134 = smul.u32 32, %s20
      $region16: #{pyramid_pooling.3} parent=11 // pred_fallthru
        _
    $region12: #{pyramid_pooling.3} parent=5 // pred_fallthru
      _
    %p135 = scmp.lt.s32.totalorder %s8, 2
    // Predicated region
    $region17: #{pyramid_pooling.3} parent=5 // pred_check
      %p136 = pneg %p135
    $region18: #{pyramid_pooling.3} parent=5 // pred_check_branch
      %138 = sbr.rel (%p136) target = $region20
    $region19: #{pyramid_pooling.3} parent=5 // pred_region
      // Predicated region
      $region21: #{pyramid_pooling.3} parent=19 // pred_check
        %p139 = pneg %p51
      $region22: #{pyramid_pooling.3} parent=19 // pred_check_branch
        %141 = sbr.rel (%p139) target = $region24
      $region23: #{pyramid_pooling.3} parent=19 // pred_region
        %s142 = smul.u32 2, %s17
        %p143 = scmp.lt.s32.totalorder %s15, 1
        %s144 = scalar_select %p143, %s15, 1
        %p145 = scmp.lt.s32.totalorder %s16, 0
        %s146 = scalar_select %p145, %s16, 0
        %p147 = scmp.lt.s32.totalorder %s142, 1
        %s148 = scalar_select %p147, %s142, 1
        %s149 = smul.addr %s146, 2
        %s150 = sadd.s32 %s148, %s149
        %s151 = smul.addr %s144, 2
        %s152 = sadd.s32 %s150, %s151
        %s153 = smul.addr %s152, 4
        %s154 = scalar_lea.vmem %s0, %s153
        %s155 = smul.u32 2, %s17
      $region24: #{pyramid_pooling.3} parent=19 // pred_fallthru
        _
    $region20: #{pyramid_pooling.3} parent=5 // pred_fallthru
      _
    %p156 = scmp.le.s32.totalorder 1, %s8
    %p157 = scmp.lt.s32.totalorder %s8, 3
    %p158 = pnand %p156, %p157
    %p159 = pneg %p158
    // Predicated region
    $region25: #{pyramid_pooling.3} parent=5 // pred_check
      _
    $region26: #{pyramid_pooling.3} parent=5 // pred_check_branch
      %161 = sbr.rel (%p158) target = $region28
    $region27: #{pyramid_pooling.3} parent=5 // pred_region
      %s162 = ssub.s32 %s8, 1
      %s163 = smul.u32 2, %s20
      %p164 = scmp.lt.s32.totalorder %s18, 1
      %s165 = scalar_select %p164, %s18, 1
      %p166 = scmp.lt.s32.totalorder %s19, 0
      %s167 = scalar_select %p166, %s19, 0
      %p168 = scmp.lt.s32.totalorder %s163, 1
      %s169 = scalar_select %p168, %s163, 1
      %s170 = smul.addr %s167, 2
      %s171 = sadd.s32 %s169, %s170
      %s172 = smul.addr %s165, 2
      %s173 = sadd.s32 %s171, %s172
      %s174 = smul.addr %s173, 4
      %s175 = scalar_lea.vmem %s0, %s174
      %p176 = pneg %p57
      %p177 = pneg %p54
      %s178 = smul.u32 32, %s20
      %p179 = scmp.lt.s32.totalorder %s178, 31
      %s180 = scalar_select %p179, %s178, 31
      %s181 = smul.addr %s180, 4
      %s182 = scalar_lea.vmem %s1, %s181
      %p183 = pneg %p83
      %p184 = pneg %p80
      %p185 = pneg %p111
      %p186 = pneg %p108
      %p187 = scmp.lt.s32.totalorder %s18, 1
      %s188 = scalar_select %p187, %s18, 1
      %p189 = scmp.lt.s32.totalorder %s19, 0
      %s190 = scalar_select %p189, %s19, 0
      %s191 = sadd.s32 %s190, %s188
      %s192 = smul.addr %s191, 4
      %s193 = scalar_lea.vmem %s2, %s192
      %s194 = smul.u32 2, %s20
      %p195 = scmp.lt.s32.totalorder %s18, 1
      %s196 = scalar_select %p195, %s18, 1
      %p197 = scmp.lt.s32.totalorder %s19, 0
      %s198 = scalar_select %p197, %s19, 0
      %p199 = scmp.lt.s32.totalorder %s194, 1
      %s200 = scalar_select %p199, %s194, 1
      %s201 = smul.addr %s198, 2
      %s202 = sadd.s32 %s200, %s201
      %s203 = smul.addr %s196, 2
      %s204 = sadd.s32 %s202, %s203
      %s205 = smul.addr %s204, 4
      %s206 = scalar_lea.vmem %s0, %s205
      %s207 = smul.u32 2, %s20
      %s208 = smul.u32 32, %s20
      %p209 = scmp.lt.s32.totalorder %s208, 31
      %s210 = scalar_select %p209, %s208, 31
      %s211 = smul.addr %s210, 4
      %s212 = scalar_lea.vmem %s1, %s211
      %s213 = smul.u32 32, %s20
      %p214 = scmp.lt.s32.totalorder %s18, 1
      %s215 = scalar_select %p214, %s18, 1
      %p216 = scmp.lt.s32.totalorder %s19, 0
      %s217 = scalar_select %p216, %s19, 0
      %s218 = sadd.s32 %s217, %s215
      %s219 = smul.addr %s218, 4
      %s220 = scalar_lea.vmem %s2, %s219
      %p222 = scmp.eq.s32.totalorder %s20, 0
      // Predicated region
      $region29: #{pyramid_pooling.3} parent=27 // pred_check
        %p223 = pneg %p222
      $region30: #{pyramid_pooling.3} parent=27 // pred_check_branch
        %225 = sbr.rel (%p223) target = $region32
      $region31: #{pyramid_pooling.3} parent=27 // pred_region
        %226 = vst [vmem:[%s220] sm:$0xf] 0.0
      $region32: #{pyramid_pooling.3} parent=27 // pred_fallthru
        _
      %v227 = vld [vmem:[%s206] sm:$0xff]
      %v228 = vld [vmem:[%s220] sm:$0xf]
      %v230 = vcombine.high %v227, %v227
      %v232 = vpack.c.bf16 %v227, %v227
      %v233 = vpack.c.bf16 %v230, %v230
      %v234 = vld [vmem:[%s212] sm:$0xf]
      %v235 = vld [vmem:[%s212 + $0x4] sm:$0xf]
      %v236 = vld [vmem:[%s212 + $0x8] sm:$0xf]
      %v237 = vld [vmem:[%s212 + $0xc] sm:$0xf]
      %v238 = vld [vmem:[%s212 + $0x10] sm:$0xf]
      %v239 = vld [vmem:[%s212 + $0x14] sm:$0xf]
      %v240 = vld [vmem:[%s212 + $0x18] sm:$0xf]
      %v241 = vld [vmem:[%s212 + $0x1c] sm:$0xf]
      %v242 = vld [vmem:[%s212 + $0x20] sm:$0xf]
      %v243 = vld [vmem:[%s212 + $0x24] sm:$0xf]
      %v244 = vld [vmem:[%s212 + $0x28] sm:$0xf]
      %v245 = vld [vmem:[%s212 + $0x2c] sm:$0xf]
      %v246 = vld [vmem:[%s212 + $0x30] sm:$0xf]
      %v247 = vld [vmem:[%s212 + $0x34] sm:$0xf]
      %v248 = vld [vmem:[%s212 + $0x38] sm:$0xf]
      %v249 = vld [vmem:[%s212 + $0x3c] sm:$0xf]
      %v250 = vld [vmem:[%s212 + $0x40] sm:$0xf]
      %v251 = vld [vmem:[%s212 + $0x44] sm:$0xf]
      %v252 = vld [vmem:[%s212 + $0x48] sm:$0xf]
      %v253 = vld [vmem:[%s212 + $0x4c] sm:$0xf]
      %v254 = vld [vmem:[%s212 + $0x50] sm:$0xf]
      %v255 = vld [vmem:[%s212 + $0x54] sm:$0xf]
      %v256 = vld [vmem:[%s212 + $0x58] sm:$0xf]
      %v257 = vld [vmem:[%s212 + $0x5c] sm:$0xf]
      %v258 = vld [vmem:[%s212 + $0x60] sm:$0xf]
      %v259 = vld [vmem:[%s212 + $0x64] sm:$0xf]
      %v260 = vld [vmem:[%s212 + $0x68] sm:$0xf]
      %v261 = vld [vmem:[%s212 + $0x6c] sm:$0xf]
      %v262 = vld [vmem:[%s212 + $0x70] sm:$0xf]
      %v263 = vld [vmem:[%s212 + $0x74] sm:$0xf]
      %v264 = vld [vmem:[%s212 + $0x78] sm:$0xf]
      %v265 = vld [vmem:[%s212 + $0x7c] sm:$0xf]
      %v298 = vunpack.c.l.b16 %v234
      %v299 = vunpack.c.l.b16 %v235
      %v300 = vunpack.c.l.b16 %v236
      %v301 = vunpack.c.l.b16 %v237
      %v302 = vunpack.c.l.b16 %v238
      %v303 = vunpack.c.l.b16 %v239
      %v304 = vunpack.c.l.b16 %v240
      %v305 = vunpack.c.l.b16 %v241
      %v306 = vunpack.c.l.b16 %v242
      %v307 = vunpack.c.l.b16 %v243
      %v308 = vunpack.c.l.b16 %v244
      %v309 = vunpack.c.l.b16 %v245
      %v310 = vunpack.c.l.b16 %v246
      %v311 = vunpack.c.l.b16 %v247
      %v312 = vunpack.c.l.b16 %v248
      %v313 = vunpack.c.l.b16 %v249
      %v314 = vunpack.c.l.b16 %v250
      %v315 = vunpack.c.l.b16 %v251
      %v316 = vunpack.c.l.b16 %v252
      %v317 = vunpack.c.l.b16 %v253
      %v318 = vunpack.c.l.b16 %v254
      %v319 = vunpack.c.l.b16 %v255
      %v320 = vunpack.c.l.b16 %v256
      %v321 = vunpack.c.l.b16 %v257
      %v322 = vunpack.c.l.b16 %v258
      %v323 = vunpack.c.l.b16 %v259
      %v324 = vunpack.c.l.b16 %v260
      %v325 = vunpack.c.l.b16 %v261
      %v326 = vunpack.c.l.b16 %v262
      %v327 = vunpack.c.l.b16 %v263
      %v328 = vunpack.c.l.b16 %v264
      %v329 = vunpack.c.l.b16 %v265
      %v330 = vpack.c.b16 %v299, %v298
      %v331 = vpack.c.b16 %v301, %v300
      %v332 = vpack.c.b16 %v303, %v302
      %v333 = vpack.c.b16 %v305, %v304
      %v334 = vpack.c.b16 %v307, %v306
      %v335 = vpack.c.b16 %v309, %v308
      %v336 = vpack.c.b16 %v311, %v310
      %v337 = vpack.c.b16 %v313, %v312
      %v338 = vpack.c.b16 %v315, %v314
      %v339 = vpack.c.b16 %v317, %v316
      %v340 = vpack.c.b16 %v319, %v318
      %v341 = vpack.c.b16 %v321, %v320
      %v342 = vpack.c.b16 %v323, %v322
      %v343 = vpack.c.b16 %v325, %v324
      %v344 = vpack.c.b16 %v327, %v326
      %v345 = vpack.c.b16 %v329, %v328
      %362 = vmatprep.subr.bf16.mxu0 0
      %363 = vmatpush1.bf16.msra.mxu0 %v337
      %364 = vmatprep.subr.bf16.mxu0 0
      %365 = vmatpush1.bf16.msra.mxu0 %v336
      %366 = vmatprep.subr.bf16.mxu0 0
      %367 = vmatpush1.bf16.msra.mxu0 %v335
      %368 = vmatprep.subr.bf16.mxu0 0
      %369 = vmatpush1.bf16.msra.mxu0 %v334
      %370 = vmatprep.subr.bf16.mxu0 0
      %371 = vmatpush1.bf16.msra.mxu0 %v333
      %372 = vmatprep.subr.bf16.mxu0 0
      %373 = vmatpush1.bf16.msra.mxu0 %v332
      %374 = vmatprep.subr.bf16.mxu0 0
      %375 = vmatpush1.bf16.msra.mxu0 %v331
      %376 = vmatprep.subr.bf16.mxu0 0
      %377 = vmatpush1.bf16.msra.mxu0 %v330
      %378 = vmatprep.subr.bf16.mxu0 0
      %379 = vmatpush2.bf16.msra.mxu0 %v345
      %380 = vmatprep.subr.bf16.mxu0 0
      %381 = vmatpush2.bf16.msra.mxu0 %v344
      %382 = vmatprep.subr.bf16.mxu0 0
      %383 = vmatpush2.bf16.msra.mxu0 %v343
      %384 = vmatprep.subr.bf16.mxu0 0
      %385 = vmatpush2.bf16.msra.mxu0 %v342
      %386 = vmatprep.subr.bf16.mxu0 0
      %387 = vmatpush2.bf16.msra.mxu0 %v341
      %388 = vmatprep.subr.bf16.mxu0 0
      %389 = vmatpush2.bf16.msra.mxu0 %v340
      %390 = vmatprep.subr.bf16.mxu0 0
      %391 = vmatpush2.bf16.msra.mxu0 %v339
      %392 = vmatprep.subr.bf16.mxu0 0
      %393 = vmatpush2.bf16.msra.mxu0 %v338
      %394 = vmatprep.mubr.bf16.mxu0 %v233
      %395 = vmatmul.mubr.bf16.gmra.mxu0 %v232
      %v396 = vpop.f32.mrf.mxu0
      %v397 = vadd.f32 0.0, %v396
      %v398 = vpop.f32.mrf.mxu0
      %v399 = vpop.f32.mrf.mxu0
      %v400 = vpop.f32.mrf.mxu0
      %401 = vdwg.mxu0
      %v402 = vadd.f32 %v228, %v397
      %403 = vst [vmem:[%s220] sm:$0xf] %v402
      %p404 = scmp.lt.s32.totalorder %s18, 1
      %s405 = scalar_select %p404, %s18, 1
      %p406 = scmp.lt.s32.totalorder %s19, 0
      %s407 = scalar_select %p406, %s19, 0
      %s408 = sadd.s32 %s407, %s405
      %s409 = smul.addr %s408, 4
      %s410 = scalar_lea.vmem %s2, %s409
      // Predicated region
      $region33: #{pyramid_pooling.3} parent=27 // pred_check
        %p411 = pneg %p108
      $region34: #{pyramid_pooling.3} parent=27 // pred_check_branch
        %413 = sbr.rel (%p411) target = $region36
      $region35: #{pyramid_pooling.3} parent=27 // pred_region
        _
      $region36: #{pyramid_pooling.3} parent=27 // pred_fallthru
        _
    $region28: #{pyramid_pooling.3} parent=5 // pred_fallthru
      _
    %p414 = scmp.le.s32.totalorder 2, %s8
    // Predicated region
    $region37: #{pyramid_pooling.3} parent=5 // pred_check
      %p415 = pneg %p414
    $region38: #{pyramid_pooling.3} parent=5 // pred_check_branch
      %417 = sbr.rel (%p415) target = $region40
    $region39: #{pyramid_pooling.3} parent=5 // pred_region
      %s418 = ssub.s32 %s8, 2
      // Predicated region
      $region41: #{pyramid_pooling.3} parent=39 // pred_check
        %p419 = pneg %p114
      $region42: #{pyramid_pooling.3} parent=39 // pred_check_branch
        %421 = sbr.rel (%p419) target = $region44
      $region43: #{pyramid_pooling.3} parent=39 // pred_region
        %p422 = scmp.lt.s32.totalorder %s21, 1
        %s423 = scalar_select %p422, %s21, 1
        %p424 = scmp.lt.s32.totalorder %s22, 0
        %s425 = scalar_select %p424, %s22, 0
        %s426 = sadd.s32 %s425, %s423
        %s427 = smul.addr %s426, 4
        %s428 = scalar_lea.vmem %s2, %s427
      $region44: #{pyramid_pooling.3} parent=39 // pred_fallthru
        _
    $region40: #{pyramid_pooling.3} parent=5 // pred_fallthru
      _
  $region6: #{pyramid_pooling.3} parent=0 // loop_footer
    %s12 = sadd.s32 1, %s8
  $region7: #{pyramid_pooling.3} parent=0 // loop_footer_branch
    %7 = sbr.rel target = $region3
  $region8: #{pyramid_pooling.3} parent=0 // loop_exit
    _

// kernel: pyramid_pooling.5
$region0: #{pyramid_pooling.5}
  #allocation0 [shape = 'u32[]', space=smem, size = 0x4, offset = 0x4, fixed_abs, tag = 'smem constant byte address 0x4 - core index']
  #allocation1 [shape = 'u32[144,128]{1,0:T(1,128)}', space=vmem, size = 0x12000, scoped, tag = 'internal scratch']
  %s0 = inlined_call_operand.vmem [shape: bf16[2,16,128], index: 0, kind: input, shape index: {}]
  %s1 = inlined_call_operand.vmem [shape: bf16[128,256], index: 1, kind: input, shape index: {}]
  %s2 = inlined_call_operand.vmem [shape: f32[2,4,256], index: 2, kind: input, shape index: {}]
  %s3 = inlined_call_operand.vmem [shape: f32[2,20,256], index: 3, kind: output, shape index: {}]
  %s4 = sld [smem:[#allocation0]]
  $region45: #{pyramid_pooling.5} parent=0
    _
  %s6 = ssub.s32 1, %s4
  %s7 = scalar_select 0, %s6, %s4
  loop: start=0, step=1, limit=4
  $region2: #{pyramid_pooling.5} parent=0 // loop_pre_header
    _
  $region3: #{pyramid_pooling.5} parent=0 // loop_header
    %s9 = sphi 0, %s13
    %p10 = scmp.ge.s32.totalorder %s9, 4
    %s16 = sphi 0, %s28
    %s17 = sphi 0, %s24
    %s18 = sphi 0, %s16
    %s19 = sphi 0, %s17
    %s20 = sphi 0, %s18
    %s21 = sphi 0, %s19
    %s31 = sphi 0, %s33
    %s34 = sphi 0, %s31
    %s35 = sphi 0, %s34
    %s51 = sphi 0, %s35
    %s57 = sphi 0, %s59
    %s60 = sphi 0, %s57
    %s61 = sphi 0, %s60
    %s77 = sphi 0, %s61
    %s85 = sphi 0, %s87
    %s88 = sphi 0, %s85
    %s89 = sphi 0, %s88
    %s105 = sphi 0, %s89
    %s113 = sphi 0, %s115
    %s116 = sphi 0, %s113
    %s117 = sphi 0, %s116
    %s133 = sphi 0, %s117
  $region4: #{pyramid_pooling.5} parent=0 // loop_header_branch
    %12 = sbr.rel (%p10) target = $region8
  $region5: #{pyramid_pooling.5} parent=0 // loop_body
    %s14 = ssub.s32 %s9, 1
    %s15 = ssub.s32 %s9, 2
    %s22 = sadd.s32 1, %s17
    %p23 = scmp.ge.s32.totalorder %s22, 1
    %s24 = scalar_select %p23, 0, %s22
    %s25 = sadd.s32 1, %s16
    %s26 = scalar_select %p23, %s25, %s16
    %p27 = scmp.ge.s32.totalorder %s26, 2
    %s28 = scalar_select %p27, 0, %s26
    %s29 = ssub.s32 %s16, %s28
    %p30 = scmp.eq.s32.totalorder %s29, 0
    %s32 = sadd.s32 %s31, 1
    %s33 = scalar_select %p30, %s31, %s32
    %p36 = pneg %p30
    %p37 = scmp.eq.s32.totalorder %s9, 1
    %p38 = por %p36, %p37
    %p39 = scmp.ne.s32.totalorder %s31, %s34
    %p40 = scmp.eq.s32.totalorder %s9, 0
    %p41 = por %p39, %p40
    %p42 = scmp.ne.s32.totalorder %s31, %s34
    %p43 = scmp.eq.s32.totalorder %s14, 1
    %p44 = por %p42, %p43
    %p45 = scmp.ne.s32.totalorder %s34, %s35
    %p46 = scmp.eq.s32.totalorder %s14, 0
    %p47 = por %p45, %p46
    %p48 = scmp.ne.s32.totalorder %s34, %s35
    %p49 = scmp.eq.s32.totalorder %s15, 1
    %p50 = por %p48, %p49
    %p52 = scmp.ne.s32.totalorder %s35, %s51
    %p53 = scmp.eq.s32.totalorder %s15, 0
    %p54 = por %p52, %p53
    %s55 = ssub.s32 %s17, %s24
    %p56 = scmp.eq.s32.totalorder %s55, 0
    %s58 = sadd.s32 %s57, 1
    %s59 = scalar_select %p56, %s57, %s58
    %p62 = pneg %p56
    %p63 = scmp.eq.s32.totalorder %s9, 1
    %p64 = por %p62, %p63
    %p65 = scmp.ne.s32.totalorder %s57, %s60
    %p66 = scmp.eq.s32.totalorder %s9, 0
    %p67 = por %p65, %p66
    %p68 = scmp.ne.s32.totalorder %s57, %s60
    %p69 = scmp.eq.s32.totalorder %s14, 1
    %p70 = por %p68, %p69
    %p71 = scmp.ne.s32.totalorder %s60, %s61
    %p72 = scmp.eq.s32.totalorder %s14, 0
    %p73 = por %p71, %p72
    %p74 = scmp.ne.s32.totalorder %s60, %s61
    %p75 = scmp.eq.s32.totalorder %s15, 1
    %p76 = por %p74, %p75
    %p78 = scmp.ne.s32.totalorder %s61, %s77
    %p79 = scmp.eq.s32.totalorder %s15, 0
    %p80 = por %p78, %p79
    %s81 = ssub.s32 %s16, %s28
    %s82 = ssub.s32 %s17, %s24
    %s83 = sor.u32 %s81, %s82
    %p84 = scmp.eq.s32.totalorder %s83, 0
    %s86 = sadd.s32 %s85, 1
    %s87 = scalar_select %p84, %s85, %s86
    %p90 = pneg %p84
    %p91 = scmp.eq.s32.totalorder %s9, 1
    %p92 = por %p90, %p91
    %p93 = scmp.ne.s32.totalorder %s85, %s88
    %p94 = scmp.eq.s32.totalorder %s9, 0
    %p95 = por %p93, %p94
    %p96 = scmp.ne.s32.totalorder %s85, %s88
    %p97 = scmp.eq.s32.totalorder %s14, 1
    %p98 = por %p96, %p97
    %p99 = scmp.ne.s32.totalorder %s88, %s89
    %p100 = scmp.eq.s32.totalorder %s14, 0
    %p101 = por %p99, %p100
    %p102 = scmp.ne.s32.totalorder %s88, %s89
    %p103 = scmp.eq.s32.totalorder %s15, 1
    %p104 = por %p102, %p103
    %p106 = scmp.ne.s32.totalorder %s89, %s105
    %p107 = scmp.eq.s32.totalorder %s15, 0
    %p108 = por %p106, %p107
    %s109 = ssub.s32 %s16, %s28
    %s110 = ssub.s32 %s17, %s24
    %s111 = sor.u32 %s109, %s110
    %p112 = scmp.eq.s32.totalorder %s111, 0
    %s114 = sadd.s32 %s113, 1
    %s115 = scalar_select %p112, %s113, %s114
    %p118 = pneg %p112
    %p119 = scmp.eq.s32.totalorder %s9, 1
    %p120 = por %p118, %p119
    %p121 = scmp.ne.s32.totalorder %s113, %s116
    %p122 = scmp.eq.s32.totalorder %s9, 0
    %p123 = por %p121, %p122
    %p124 = scmp.ne.s32.totalorder %s113, %s116
    %p125 = scmp.eq.s32.totalorder %s14, 1
    %p126 = por %p124, %p125
    %p127 = scmp.ne.s32.totalorder %s116, %s117
    %p128 = scmp.eq.s32.totalorder %s14, 0
    %p129 = por %p127, %p128
    %p130 = scmp.ne.s32.totalorder %s116, %s117
    %p131 = scmp.eq.s32.totalorder %s15, 1
    %p132 = por %p130, %p131
    %p134 = scmp.ne.s32.totalorder %s117, %s133
    %p135 = scmp.eq.s32.totalorder %s15, 0
    %p136 = por %p134, %p135
    %p137 = scmp.le.s32.totalorder 1, %s9
    %p138 = scmp.lt.s32.totalorder %s9, 3
    %p139 = pnand %p137, %p138
    %p140 = pneg %p139
    // Predicated region
    $region9: #{pyramid_pooling.5} parent=5 // pred_check
      _
    $region10: #{pyramid_pooling.5} parent=5 // pred_check_branch
      %142 = sbr.rel (%p139) target = $region12
    $region11: #{pyramid_pooling.5} parent=5 // pred_region
      %s143 = ssub.s32 %s9, 1
      // Predicated region
      $region13: #{pyramid_pooling.5} parent=11 // pred_check
        %p144 = pneg %p73
      $region14: #{pyramid_pooling.5} parent=11 // pred_check_branch
        %146 = sbr.rel (%p144) target = $region16
      $region15: #{pyramid_pooling.5} parent=11 // pred_region
        %s147 = smul.u32 2, %s19
        %p148 = scmp.lt.s32.totalorder %s147, 1
        %s149 = scalar_select %p148, %s147, 1
        %s150 = smul.addr %s149, 4
        %s151 = scalar_lea.vmem %s1, %s150
        %s152 = smul.u32 2, %s19
      $region16: #{pyramid_pooling.5} parent=11 // pred_fallthru
        _
    $region12: #{pyramid_pooling.5} parent=5 // pred_fallthru
      _
    %p153 = scmp.lt.s32.totalorder %s9, 2
    // Predicated region
    $region17: #{pyramid_pooling.5} parent=5 // pred_check
      %p154 = pneg %p153
    $region18: #{pyramid_pooling.5} parent=5 // pred_check_branch
      %156 = sbr.rel (%p154) target = $region20
    $region19: #{pyramid_pooling.5} parent=5 // pred_region
      // Predicated region
      $region21: #{pyramid_pooling.5} parent=19 // pred_check
        %p157 = pneg %p41
      $region22: #{pyramid_pooling.5} parent=19 // pred_check_branch
        %159 = sbr.rel (%p157) target = $region24
      $region23: #{pyramid_pooling.5} parent=19 // pred_region
        %p160 = scmp.lt.s32.totalorder %s16, 1
        %s161 = scalar_select %p160, %s16, 1
        %s162 = smul.addr %s161, 2
        %s163 = smul.addr %s162, 4
        %s164 = scalar_lea.vmem %s0, %s163
      $region24: #{pyramid_pooling.5} parent=19 // pred_fallthru
        _
      // Predicated region
      $region25: #{pyramid_pooling.5} parent=19 // pred_check
        %p165 = pneg %p95
      $region26: #{pyramid_pooling.5} parent=19 // pred_check_branch
        %167 = sbr.rel (%p165) target = $region28
      $region27: #{pyramid_pooling.5} parent=19 // pred_region
        %s168 = smul.u32 2, %s17
        %p169 = scmp.lt.s32.totalorder %s16, 1
        %s170 = scalar_select %p169, %s16, 1
        %p171 = scmp.lt.s32.totalorder %s168, 1
        %s172 = scalar_select %p171, %s168, 1
        %s173 = smul.addr %s170, 2
        %s174 = sadd.s32 %s172, %s173
        %s175 = smul.addr %s174, 4
        %s176 = scalar_lea.vmem %s2, %s175
        %s177 = smul.u32 2, %s17
      $region28: #{pyramid_pooling.5} parent=19 // pred_fallthru
        _
    $region20: #{pyramid_pooling.5} parent=5 // pred_fallthru
      _
    %p178 = scmp.le.s32.totalorder 1, %s9
    %p179 = scmp.lt.s32.totalorder %s9, 3
    %p180 = pnand %p178, %p179
    %p181 = pneg %p180
    // Predicated region
    $region29: #{pyramid_pooling.5} parent=5 // pred_check
      _
    $region30: #{pyramid_pooling.5} parent=5 // pred_check_branch
      %183 = sbr.rel (%p180) target = $region32
    $region31: #{pyramid_pooling.5} parent=5 // pred_region
      %s184 = ssub.s32 %s9, 1
      %p185 = scmp.lt.s32.totalorder %s18, 1
      %s186 = scalar_select %p185, %s18, 1
      %s187 = smul.addr %s186, 2
      %s188 = smul.addr %s187, 4
      %s189 = scalar_lea.vmem %s0, %s188
      %p190 = pneg %p47
      %p191 = pneg %p44
      %s192 = smul.u32 2, %s19
      %p193 = scmp.lt.s32.totalorder %s192, 1
      %s194 = scalar_select %p193, %s192, 1
      %s195 = smul.addr %s194, 4
      %s196 = scalar_lea.vmem %s1, %s195
      %p197 = pneg %p73
      %p198 = pneg %p70
      %s199 = smul.u32 2, %s19
      %p200 = scmp.lt.s32.totalorder %s18, 1
      %s201 = scalar_select %p200, %s18, 1
      %p202 = scmp.lt.s32.totalorder %s199, 1
      %s203 = scalar_select %p202, %s199, 1
      %s204 = smul.addr %s201, 2
      %s205 = sadd.s32 %s203, %s204
      %s206 = smul.addr %s205, 4
      %s207 = scalar_lea.vmem %s2, %s206
      %p208 = pneg %p101
      %p209 = pneg %p98
      %p210 = pneg %p129
      %p211 = pneg %p126
      %s212 = smul.u32 2, %s19
      %p213 = scmp.lt.s32.totalorder %s18, 1
      %s214 = scalar_select %p213, %s18, 1
      %p215 = scmp.lt.s32.totalorder %s212, 1
      %s216 = scalar_select %p215, %s212, 1
      %s217 = smul.addr %s214, 6
      %s218 = sadd.s32 %s216, %s217
      %s219 = smul.addr %s218, 8
      %s220 = scalar_lea.vmem %s3, %s219
      %p221 = scmp.lt.s32.totalorder %s18, 1
      %s222 = scalar_select %p221, %s18, 1
      %s223 = smul.addr %s222, 2
      %s224 = smul.addr %s223, 4
      %s225 = scalar_lea.vmem %s0, %s224
      %s226 = smul.u32 2, %s19
      %p227 = scmp.lt.s32.totalorder %s226, 1
      %s228 = scalar_select %p227, %s226, 1
      %s229 = smul.addr %s228, 4
      %s230 = scalar_lea.vmem %s1, %s229
      %s231 = smul.u32 2, %s19
      %s232 = smul.u32 2, %s19
      %p233 = scmp.lt.s32.totalorder %s18, 1
      %s234 = scalar_select %p233, %s18, 1
      %p235 = scmp.lt.s32.totalorder %s232, 1
      %s236 = scalar_select %p235, %s232, 1
      %s237 = smul.addr %s234, 2
      %s238 = sadd.s32 %s236, %s237
      %s239 = smul.addr %s238, 4
      %s240 = scalar_lea.vmem %s2, %s239
      %s241 = smul.u32 2, %s19
      %s242 = smul.u32 2, %s19
      %p243 = scmp.lt.s32.totalorder %s18, 1
      %s244 = scalar_select %p243, %s18, 1
      %p245 = scmp.lt.s32.totalorder %s242, 1
      %s246 = scalar_select %p245, %s242, 1
      %s247 = smul.addr %s244, 6
      %s248 = sadd.s32 %s246, %s247
      %s249 = smul.addr %s248, 8
      %s250 = scalar_lea.vmem %s3, %s249
      %s251 = smul.u32 2, %s19
      %v253 = vld [vmem:[%s225] sm:$0xf]
      %v254 = vld [vmem:[%s225 + $0x4] sm:$0xf]
      %v255 = vld [vmem:[%s230] sm:$0xff]
      %v256 = vld [vmem:[%s230 + $0x8] sm:$0xff]
      %v257 = vld [vmem:[%s230 + $0x10] sm:$0xff]
      %v258 = vld [vmem:[%s230 + $0x18] sm:$0xff]
      %v259 = vld [vmem:[%s230 + $0x20] sm:$0xff]
      %v260 = vld [vmem:[%s230 + $0x28] sm:$0xff]
      %v261 = vld [vmem:[%s230 + $0x30] sm:$0xff]
      %v262 = vld [vmem:[%s230 + $0x38] sm:$0xff]
      %v263 = vld [vmem:[%s230 + $0x40] sm:$0xff]
      %v264 = vld [vmem:[%s230 + $0x48] sm:$0xff]
      %v265 = vld [vmem:[%s230 + $0x50] sm:$0xff]
      %v266 = vld [vmem:[%s230 + $0x58] sm:$0xff]
      %v267 = vld [vmem:[%s230 + $0x60] sm:$0xff]
      %v268 = vld [vmem:[%s230 + $0x68] sm:$0xff]
      %v269 = vld [vmem:[%s230 + $0x70] sm:$0xff]
      %v270 = vld [vmem:[%s230 + $0x78] sm:$0xff]
      %v273 = vunpack.c.l.b16 %v253
      %v274 = vunpack.c.l.b16 %v254
      %v275 = vpack.c.b16 %v274, %v273
      %v293 = vunpack.c.l.b16 %v255
      %v294 = vunpack.c.h.b16 %v255
      %v295 = vunpack.c.l.b16 %v256
      %v296 = vunpack.c.h.b16 %v256
      %v297 = vunpack.c.l.b16 %v257
      %v298 = vunpack.c.h.b16 %v257
      %v299 = vunpack.c.l.b16 %v258
      %v300 = vunpack.c.h.b16 %v258
      %v301 = vunpack.c.l.b16 %v259
      %v302 = vunpack.c.h.b16 %v259
      %v303 = vunpack.c.l.b16 %v260
      %v304 = vunpack.c.h.b16 %v260
      %v305 = vunpack.c.l.b16 %v261
      %v306 = vunpack.c.h.b16 %v261
      %v307 = vunpack.c.l.b16 %v262
      %v308 = vunpack.c.h.b16 %v262
      %v309 = vunpack.c.l.b16 %v263
      %v310 = vunpack.c.h.b16 %v263
      %v311 = vunpack.c.l.b16 %v264
      %v312 = vunpack.c.h.b16 %v264
      %v313 = vunpack.c.l.b16 %v265
      %v314 = vunpack.c.h.b16 %v265
      %v315 = vunpack.c.l.b16 %v266
      %v316 = vunpack.c.h.b16 %v266
      %v317 = vunpack.c.l.b16 %v267
      %v318 = vunpack.c.h.b16 %v267
      %v319 = vunpack.c.l.b16 %v268
      %v320 = vunpack.c.h.b16 %v268
      %v321 = vunpack.c.l.b16 %v269
      %v322 = vunpack.c.h.b16 %v269
      %v323 = vunpack.c.l.b16 %v270
      %v324 = vunpack.c.h.b16 %v270
      %v325 = vpack.c.b16 %v295, %v293
      %v326 = vpack.c.b16 %v296, %v294
      %v327 = vpack.c.b16 %v299, %v297
      %v328 = vpack.c.b16 %v300, %v298
      %v329 = vpack.c.b16 %v303, %v301
      %v330 = vpack.c.b16 %v304, %v302
      %v331 = vpack.c.b16 %v307, %v305
      %v332 = vpack.c.b16 %v308, %v306
      %v333 = vpack.c.b16 %v311, %v309
      %v334 = vpack.c.b16 %v312, %v310
      %v335 = vpack.c.b16 %v315, %v313
      %v336 = vpack.c.b16 %v316, %v314
      %v337 = vpack.c.b16 %v319, %v317
      %v338 = vpack.c.b16 %v320, %v318
      %v339 = vpack.c.b16 %v323, %v321
      %v340 = vpack.c.b16 %v324, %v322
      %357 = vmatprep.subr.bf16.mxu0 %v340
      %358 = vmatpush1.bf16.msra.mxu0 %v339
      %359 = vmatprep.subr.bf16.mxu0 %v338
      %360 = vmatpush1.bf16.msra.mxu0 %v337
      %361 = vmatprep.subr.bf16.mxu0 %v336
      %362 = vmatpush1.bf16.msra.mxu0 %v335
      %363 = vmatprep.subr.bf16.mxu0 %v334
      %364 = vmatpush1.bf16.msra.mxu0 %v333
      %365 = vmatprep.subr.bf16.mxu0 %v332
      %366 = vmatpush1.bf16.msra.mxu0 %v331
      %367 = vmatprep.subr.bf16.mxu0 %v330
      %368 = vmatpush1.bf16.msra.mxu0 %v329
      %369 = vmatprep.subr.bf16.mxu0 %v328
      %370 = vmatpush1.bf16.msra.mxu0 %v327
      %371 = vmatprep.subr.bf16.mxu0 %v326
      %372 = vmatpush1.bf16.msra.mxu0 %v325
      %373 = vmatprep.subr.bf16.mxu0 0
      %374 = vmatpush2.bf16.msra.mxu0 0
      %375 = vmatprep.subr.bf16.mxu0 0
      %376 = vmatpush2.bf16.msra.mxu0 0
      %377 = vmatprep.subr.bf16.mxu0 0
      %378 = vmatpush2.bf16.msra.mxu0 0
      %379 = vmatprep.subr.bf16.mxu0 0
      %380 = vmatpush2.bf16.msra.mxu0 0
      %381 = vmatprep.subr.bf16.mxu0 0
      %382 = vmatpush2.bf16.msra.mxu0 0
      %383 = vmatprep.subr.bf16.mxu0 0
      %384 = vmatpush2.bf16.msra.mxu0 0
      %385 = vmatprep.subr.bf16.mxu0 0
      %386 = vmatpush2.bf16.msra.mxu0 0
      %387 = vmatprep.subr.bf16.mxu0 0
      %388 = vmatpush2.bf16.msra.mxu0 0
      %389 = vmatprep.mubr.bf16.mxu0 0
      %390 = vmatmul.mubr.bf16.gmra.mxu0 %v275
      %v391 = vpop.f32.mrf.mxu0
      %v392 = vadd.f32 0.0, %v391
      %v393 = vpop.f32.mrf.mxu0
      %v394 = vadd.f32 0.0, %v393
      %v395 = vpop.f32.mrf.mxu0
      %v396 = vadd.f32 0.0, %v395
      %v397 = vpop.f32.mrf.mxu0
      %v398 = vadd.f32 0.0, %v397
      %399 = vdwg.mxu0
      %400 = vst [vmem:[%s250] sm:$0xff] %v392
      %401 = vst [vmem:[%s250 + $0x8] sm:$0xff] %v394
      %402 = vst [vmem:[%s250 + $0x10] sm:$0xff] %v396
      %403 = vst [vmem:[%s250 + $0x18] sm:$0xff] %v398
      %v404 = vld [vmem:[%s240] sm:$0xff]
      %v406 = vcombine.high %v404, %v404
      %408 = vst [vmem:[%s250 + $0x20] sm:$0xf] %v404
      %409 = vst [vmem:[%s250 + $0x28] sm:$0xf] %v406
      %s410 = smul.u32 2, %s19
      %p411 = scmp.lt.s32.totalorder %s18, 1
      %s412 = scalar_select %p411, %s18, 1
      %p413 = scmp.lt.s32.totalorder %s410, 1
      %s414 = scalar_select %p413, %s410, 1
      %s415 = smul.addr %s412, 6
      %s416 = sadd.s32 %s414, %s415
      %s417 = smul.addr %s416, 8
      %s418 = scalar_lea.vmem %s3, %s417
      // Predicated region
      $region33: #{pyramid_pooling.5} parent=31 // pred_check
        %p419 = pneg %p126
      $region34: #{pyramid_pooling.5} parent=31 // pred_check_branch
        %421 = sbr.rel (%p419) target = $region36
      $region35: #{pyramid_pooling.5} parent=31 // pred_region
        %s422 = smul.u32 2, %s19
      $region36: #{pyramid_pooling.5} parent=31 // pred_fallthru
        _
    $region32: #{pyramid_pooling.5} parent=5 // pred_fallthru
      _
    %p423 = scmp.le.s32.totalorder 2, %s9
    // Predicated region
    $region37: #{pyramid_pooling.5} parent=5 // pred_check
      %p424 = pneg %p423
    $region38: #{pyramid_pooling.5} parent=5 // pred_check_branch
      %426 = sbr.rel (%p424) target = $region40
    $region39: #{pyramid_pooling.5} parent=5 // pred_region
      %s427 = ssub.s32 %s9, 2
      // Predicated region
      $region41: #{pyramid_pooling.5} parent=39 // pred_check
        %p428 = pneg %p132
      $region42: #{pyramid_pooling.5} parent=39 // pred_check_branch
        %430 = sbr.rel (%p428) target = $region44
      $region43: #{pyramid_pooling.5} parent=39 // pred_region
        %s431 = smul.u32 2, %s21
        %p432 = scmp.lt.s32.totalorder %s20, 1
        %s433 = scalar_select %p432, %s20, 1
        %p434 = scmp.lt.s32.totalorder %s431, 1
        %s435 = scalar_select %p434, %s431, 1
        %s436 = smul.addr %s433, 6
        %s437 = sadd.s32 %s435, %s436
        %s438 = smul.addr %s437, 8
        %s439 = scalar_lea.vmem %s3, %s438
      $region44: #{pyramid_pooling.5} parent=39 // pred_fallthru
        _
    $region40: #{pyramid_pooling.5} parent=5 // pred_fallthru
      _
  $region6: #{pyramid_pooling.5} parent=0 // loop_footer
    %s13 = sadd.s32 1, %s9
  $region7: #{pyramid_pooling.5} parent=0 // loop_footer_branch
    %8 = sbr.rel target = $region3
  $region8: #{pyramid_pooling.5} parent=0 // loop_exit
    _

// kernel: pyramid_pooling.4
$region0: #{pyramid_pooling.4}
  #allocation0 [shape = 'u32[]', space=smem, size = 0x4, offset = 0x4, fixed_abs, tag = 'smem constant byte address 0x4 - core index']
  #allocation1 [shape = 'u32[144,128]{1,0:T(1,128)}', space=vmem, size = 0x12000, scoped, tag = 'internal scratch']
  %s0 = inlined_call_operand.vmem [shape: f32[2,4,128], index: 0, kind: input, shape index: {}]
  %s1 = inlined_call_operand.vmem [shape: bf16[16,4], index: 1, kind: input, shape index: {}]
  %s2 = inlined_call_operand.vmem [shape: f32[16,1], index: 2, kind: input, shape index: {}]
  %s3 = inlined_call_operand.vmem [shape: bf16[2,16,128], index: 3, kind: output, shape index: {}]
  %s4 = sld [smem:[#allocation0]]
  $region45: #{pyramid_pooling.4} parent=0
    _
  %s6 = ssub.s32 1, %s4
  %s7 = scalar_select 0, %s6, %s4
  loop: start=0, step=1, limit=4
  $region2: #{pyramid_pooling.4} parent=0 // loop_pre_header
    _
  $region3: #{pyramid_pooling.4} parent=0 // loop_header
    %s9 = sphi 0, %s13
    %p10 = scmp.ge.s32.totalorder %s9, 4
    %s19 = sphi 0, %s21
    %s22 = sphi 0, %s19
    %s23 = sphi 0, %s22
    %s39 = sphi 0, %s23
    %s43 = sphi 0, %s43
    %s45 = sphi 0, %s43
    %s46 = sphi 0, %s45
    %s60 = sphi 0, %s46
    %s64 = sphi 0, %s64
    %s66 = sphi 0, %s64
    %s67 = sphi 0, %s66
    %s81 = sphi 0, %s67
    %s87 = sphi 0, %s89
    %s90 = sphi 0, %s87
    %s91 = sphi 0, %s90
    %s107 = sphi 0, %s91
  $region4: #{pyramid_pooling.4} parent=0 // loop_header_branch
    %12 = sbr.rel (%p10) target = $region8
  $region5: #{pyramid_pooling.4} parent=0 // loop_body
    %s14 = ssub.s32 %s9, 1
    %s15 = ssub.s32 %s9, 2
    %s16 = sadd.s32 %s9, 1
    %s17 = ssub.s32 %s9, %s16
    %p18 = scmp.eq.s32.totalorder %s17, 0
    %s20 = sadd.s32 %s19, 1
    %s21 = scalar_select %p18, %s19, %s20
    %p24 = pneg %p18
    %p25 = scmp.eq.s32.totalorder %s9, 1
    %p26 = por %p24, %p25
    %p27 = scmp.ne.s32.totalorder %s19, %s22
    %p28 = scmp.eq.s32.totalorder %s9, 0
    %p29 = por %p27, %p28
    %p30 = scmp.ne.s32.totalorder %s19, %s22
    %p31 = scmp.eq.s32.totalorder %s14, 1
    %p32 = por %p30, %p31
    %p33 = scmp.ne.s32.totalorder %s22, %s23
    %p34 = scmp.eq.s32.totalorder %s14, 0
    %p35 = por %p33, %p34
    %p36 = scmp.ne.s32.totalorder %s22, %s23
    %p37 = scmp.eq.s32.totalorder %s15, 1
    %p38 = por %p36, %p37
    %p40 = scmp.ne.s32.totalorder %s23, %s39
    %p41 = scmp.eq.s32.totalorder %s15, 0
    %p42 = por %p40, %p41
    %s44 = sadd.s32 %s43, 1
    %p47 = scmp.eq.s32.totalorder %s9, 1
    %p48 = scmp.ne.s32.totalorder %s43, %s45
    %p49 = scmp.eq.s32.totalorder %s9, 0
    %p50 = por %p48, %p49
    %p51 = scmp.ne.s32.totalorder %s43, %s45
    %p52 = scmp.eq.s32.totalorder %s14, 1
    %p53 = por %p51, %p52
    %p54 = scmp.ne.s32.totalorder %s45, %s46
    %p55 = scmp.eq.s32.totalorder %s14, 0
    %p56 = por %p54, %p55
    %p57 = scmp.ne.s32.totalorder %s45, %s46
    %p58 = scmp.eq.s32.totalorder %s15, 1
    %p59 = por %p57, %p58
    %p61 = scmp.ne.s32.totalorder %s46, %s60
    %p62 = scmp.eq.s32.totalorder %s15, 0
    %p63 = por %p61, %p62
    %s65 = sadd.s32 %s64, 1
    %p68 = scmp.eq.s32.totalorder %s9, 1
    %p69 = scmp.ne.s32.totalorder %s64, %s66
    %p70 = scmp.eq.s32.totalorder %s9, 0
    %p71 = por %p69, %p70
    %p72 = scmp.ne.s32.totalorder %s64, %s66
    %p73 = scmp.eq.s32.totalorder %s14, 1
    %p74 = por %p72, %p73
    %p75 = scmp.ne.s32.totalorder %s66, %s67
    %p76 = scmp.eq.s32.totalorder %s14, 0
    %p77 = por %p75, %p76
    %p78 = scmp.ne.s32.totalorder %s66, %s67
    %p79 = scmp.eq.s32.totalorder %s15, 1
    %p80 = por %p78, %p79
    %p82 = scmp.ne.s32.totalorder %s67, %s81
    %p83 = scmp.eq.s32.totalorder %s15, 0
    %p84 = por %p82, %p83
    %s85 = ssub.s32 %s9, %s16
    %p86 = scmp.eq.s32.totalorder %s85, 0
    %s88 = sadd.s32 %s87, 1
    %s89 = scalar_select %p86, %s87, %s88
    %p92 = pneg %p86
    %p93 = scmp.eq.s32.totalorder %s9, 1
    %p94 = por %p92, %p93
    %p95 = scmp.ne.s32.totalorder %s87, %s90
    %p96 = scmp.eq.s32.totalorder %s9, 0
    %p97 = por %p95, %p96
    %p98 = scmp.ne.s32.totalorder %s87, %s90
    %p99 = scmp.eq.s32.totalorder %s14, 1
    %p100 = por %p98, %p99
    %p101 = scmp.ne.s32.totalorder %s90, %s91
    %p102 = scmp.eq.s32.totalorder %s14, 0
    %p103 = por %p101, %p102
    %p104 = scmp.ne.s32.totalorder %s90, %s91
    %p105 = scmp.eq.s32.totalorder %s15, 1
    %p106 = por %p104, %p105
    %p108 = scmp.ne.s32.totalorder %s91, %s107
    %p109 = scmp.eq.s32.totalorder %s15, 0
    %p110 = por %p108, %p109
    %p111 = scmp.le.s32.totalorder 1, %s9
    %p112 = scmp.lt.s32.totalorder %s9, 3
    %p113 = pnand %p111, %p112
    %p114 = pneg %p113
    // Predicated region
    $region9: #{pyramid_pooling.4} parent=5 // pred_check
      _
    $region10: #{pyramid_pooling.4} parent=5 // pred_check_branch
      %116 = sbr.rel (%p113) target = $region12
    $region11: #{pyramid_pooling.4} parent=5 // pred_region
      %s117 = ssub.s32 %s9, 1
      // Predicated region
      $region13: #{pyramid_pooling.4} parent=11 // pred_check
        %p118 = pneg %p56
      $region14: #{pyramid_pooling.4} parent=11 // pred_check_branch
        %120 = sbr.rel (%p118) target = $region16
      $region15: #{pyramid_pooling.4} parent=11 // pred_region
        _
      $region16: #{pyramid_pooling.4} parent=11 // pred_fallthru
        _
      // Predicated region
      $region17: #{pyramid_pooling.4} parent=11 // pred_check
        %p121 = pneg %p77
      $region18: #{pyramid_pooling.4} parent=11 // pred_check_branch
        %123 = sbr.rel (%p121) target = $region20
      $region19: #{pyramid_pooling.4} parent=11 // pred_region
        _
      $region20: #{pyramid_pooling.4} parent=11 // pred_fallthru
        _
    $region12: #{pyramid_pooling.4} parent=5 // pred_fallthru
      _
    %p124 = scmp.lt.s32.totalorder %s9, 2
    // Predicated region
    $region21: #{pyramid_pooling.4} parent=5 // pred_check
      %p125 = pneg %p124
    $region22: #{pyramid_pooling.4} parent=5 // pred_check_branch
      %127 = sbr.rel (%p125) target = $region24
    $region23: #{pyramid_pooling.4} parent=5 // pred_region
      // Predicated region
      $region25: #{pyramid_pooling.4} parent=23 // pred_check
        %p128 = pneg %p29
      $region26: #{pyramid_pooling.4} parent=23 // pred_check_branch
        %130 = sbr.rel (%p128) target = $region28
      $region27: #{pyramid_pooling.4} parent=23 // pred_region
        %p131 = scmp.lt.s32.totalorder %s9, 1
        %s132 = scalar_select %p131, %s9, 1
        %s133 = smul.addr %s132, 4
        %s134 = scalar_lea.vmem %s0, %s133
      $region28: #{pyramid_pooling.4} parent=23 // pred_fallthru
        _
    $region24: #{pyramid_pooling.4} parent=5 // pred_fallthru
      _
    %p135 = scmp.le.s32.totalorder 1, %s9
    %p136 = scmp.lt.s32.totalorder %s9, 3
    %p137 = pnand %p135, %p136
    %p138 = pneg %p137
    // Predicated region
    $region29: #{pyramid_pooling.4} parent=5 // pred_check
      _
    $region30: #{pyramid_pooling.4} parent=5 // pred_check_branch
      %140 = sbr.rel (%p137) target = $region32
    $region31: #{pyramid_pooling.4} parent=5 // pred_region
      %s141 = ssub.s32 %s9, 1
      %p142 = scmp.lt.s32.totalorder %s14, 1
      %s143 = scalar_select %p142, %s14, 1
      %s144 = smul.addr %s143, 4
      %s145 = scalar_lea.vmem %s0, %s144
      %p146 = pneg %p35
      %p147 = pneg %p32
      %p148 = pneg %p56
      %p149 = pneg %p53
      %p150 = pneg %p77
      %p151 = pneg %p74
      %p152 = pneg %p103
      %p153 = pneg %p100
      %p154 = scmp.lt.s32.totalorder %s14, 1
      %s155 = scalar_select %p154, %s14, 1
      %s156 = smul.addr %s155, 2
      %s157 = smul.addr %s156, 4
      %s158 = scalar_lea.vmem %s3, %s157
      %p159 = scmp.lt.s32.totalorder %s14, 1
      %s160 = scalar_select %p159, %s14, 1
      %s161 = smul.addr %s160, 4
      %s162 = scalar_lea.vmem %s0, %s161
      %p163 = scmp.lt.s32.totalorder %s14, 1
      %s164 = scalar_select %p163, %s14, 1
      %s165 = smul.addr %s164, 2
      %s166 = smul.addr %s165, 4
      %s167 = scalar_lea.vmem %s3, %s166
      %v169 = vld [vmem:[%s162] sm:$0xf]
      %v170 = vpack.c.bf16 %v169, %v169
      %v171 = vld [vmem:[%s1] sm:$0xf]
      %v172 = vld [vmem:[%s1 + $0x4] sm:$0xf]
      %v173 = vld [vmem:[%s2] sm:$0xff]
      %v174 = vld [vmem:[%s2 + $0x8] sm:$0xff]
      %176 = vset.pattern.permute.xlu0 0
      %177 = vperm.xlu0 %176, %v173
      %v178 = vpop.permute.xlu0 %177
      %181 = vset.pattern.permute.xlu0 0
      %182 = vperm.xlu0 %181, %v174
      %v183 = vpop.permute.xlu0 %182
      %v187 = vunpack.c.l.b16 %v171
      %v188 = vunpack.c.l.b16 %v172
      %v189 = vpack.c.b16 %v188, %v187
      %vm190 = vcmask 31744
      %v192 = vsel %vm190, %v189, 0
      %vm194 = vcmask 1041408
      %v196 = vsel %vm194, %v170, 0
      %198 = vmatprep.subr.bf16.mxu0 0
      %199 = vmatpush1.bf16.msra.mxu0 0
      %200 = vmatprep.subr.bf16.mxu0 0
      %201 = vmatpush1.bf16.msra.mxu0 0
      %202 = vmatprep.subr.bf16.mxu0 0
      %203 = vmatpush1.bf16.msra.mxu0 0
      %204 = vmatprep.subr.bf16.mxu0 0
      %205 = vmatpush1.bf16.msra.mxu0 0
      %206 = vmatprep.subr.bf16.mxu0 0
      %207 = vmatpush1.bf16.msra.mxu0 0
      %208 = vmatprep.subr.bf16.mxu0 0
      %209 = vmatpush1.bf16.msra.mxu0 0
      %210 = vmatprep.subr.bf16.mxu0 0
      %211 = vmatpush1.bf16.msra.mxu0 0
      %212 = vmatprep.subr.bf16.mxu0 0
      %213 = vmatpush1.bf16.msra.mxu0 %v196
      %214 = vmatprep.subr.bf16.mxu0 0
      %215 = vmatpush2.bf16.msra.mxu0 0
      %216 = vmatprep.subr.bf16.mxu0 0
      %217 = vmatpush2.bf16.msra.mxu0 0
      %218 = vmatprep.subr.bf16.mxu0 0
      %219 = vmatpush2.bf16.msra.mxu0 0
      %220 = vmatprep.subr.bf16.mxu0 0
      %221 = vmatpush2.bf16.msra.mxu0 0
      %222 = vmatprep.subr.bf16.mxu0 0
      %223 = vmatpush2.bf16.msra.mxu0 0
      %224 = vmatprep.subr.bf16.mxu0 0
      %225 = vmatpush2.bf16.msra.mxu0 0
      %226 = vmatprep.subr.bf16.mxu0 0
      %227 = vmatpush2.bf16.msra.mxu0 0
      %228 = vmatprep.subr.bf16.mxu0 0
      %229 = vmatpush2.bf16.msra.mxu0 0
      %230 = vmatprep.mubr.bf16.mxu0 0
      %231 = vmatmul.mubr.bf16.gmra.mxu0 %v192
      %v232 = vpop.f32.mrf.mxu0
      %v233 = vadd.f32 %v178, %v232
      %v234 = vpop.f32.mrf.mxu0
      %v235 = vpop.f32.mrf.mxu0
      %v236 = vadd.f32 %v183, %v235
      %v237 = vpop.f32.mrf.mxu0
      %238 = vdwg.mxu0
      %v239 = vmax.f32 %v233, 0.0
      %v240 = vmax.f32 %v236, 0.0
      %v241 = vlaneseq
      %v242 = vshrl.u32 %v241, 7
      %v243 = vadd.s32 %v242, 8
      %v244 = vlaneseq
      %v245 = vand.u32 %v244, 127
      %vm246 = vcmp.ge.s32.totalorder %v242, 4
      %vm247 = vcmp.ge.s32.totalorder %v243, 4
      %v248 = vsel %vm246, 1, 0
      %v249 = vsel %vm247, 1, 0
      %vm250 = vcmp.ge.s32.totalorder %v245, 1
      %v251 = vsel %vm250, 1, 0
      %vm252 = vcmp.ge.s32.totalorder %v242, 8
      %vm253 = vcmp.ge.s32.totalorder %v243, 8
      %v254 = vsel %vm252, 1, 0
      %v255 = vsel %vm253, 1, 0
      %v256 = vadd.s32 %v248, %v254
      %v257 = vadd.s32 %v249, %v255
      %vm258 = vcmp.ge.s32.totalorder %v245, 5
      %v259 = vsel %vm258, 1, 0
      %v260 = vadd.s32 %v251, %v259
      %vm261 = vcmp.ge.s32.totalorder %v242, 12
      %vm262 = vcmp.ge.s32.totalorder %v243, 12
      %v263 = vsel %vm261, 1, 0
      %v264 = vsel %vm262, 1, 0
      %v265 = vadd.s32 %v256, %v263
      %v266 = vadd.s32 %v257, %v264
      %vm267 = vcmp.ge.s32.totalorder %v245, 21
      %v268 = vsel %vm267, 1, 0
      %v269 = vadd.s32 %v260, %v268
      %vm270 = vcmp.eq.s32.totalorder %v265, %v269
      %vm271 = vcmp.eq.s32.totalorder %v266, %v269
      %vm272 = vcmp.lt.s32.totalorder %v245, 57
      %vm273 = vmand %vm270, %vm272
      %vm274 = vmand %vm271, %vm272
      %v275 = vsel %vm273, %v239, 0.0
      %v276 = vsel %vm274, %v240, 0.0
      %v277 = vpack.c.bf16 %v276, %v275
      %v279 = vunpack.c.l.b16 %v277
      %v280 = vunpack.c.h.b16 %v277
      %v281 = vpack.c.b16 %v279, %v279
      %v282 = vpack.c.b16 %v280, %v280
      %285 = vst [vmem:[%s167] sm:$0xf] %v281
      %286 = vst [vmem:[%s167 + $0x4] sm:$0xf] %v282
      %p287 = scmp.lt.s32.totalorder %s14, 1
      %s288 = scalar_select %p287, %s14, 1
      %s289 = smul.addr %s288, 2
      %s290 = smul.addr %s289, 4
      %s291 = scalar_lea.vmem %s3, %s290
      // Predicated region
      $region33: #{pyramid_pooling.4} parent=31 // pred_check
        %p292 = pneg %p100
      $region34: #{pyramid_pooling.4} parent=31 // pred_check_branch
        %294 = sbr.rel (%p292) target = $region36
      $region35: #{pyramid_pooling.4} parent=31 // pred_region
        _
      $region36: #{pyramid_pooling.4} parent=31 // pred_fallthru
        _
    $region32: #{pyramid_pooling.4} parent=5 // pred_fallthru
      _
    %p295 = scmp.le.s32.totalorder 2, %s9
    // Predicated region
    $region37: #{pyramid_pooling.4} parent=5 // pred_check
      %p296 = pneg %p295
    $region38: #{pyramid_pooling.4} parent=5 // pred_check_branch
      %298 = sbr.rel (%p296) target = $region40
    $region39: #{pyramid_pooling.4} parent=5 // pred_region
      %s299 = ssub.s32 %s9, 2
      // Predicated region
      $region41: #{pyramid_pooling.4} parent=39 // pred_check
        %p300 = pneg %p106
      $region42: #{pyramid_pooling.4} parent=39 // pred_check_branch
        %302 = sbr.rel (%p300) target = $region44
      $region43: #{pyramid_pooling.4} parent=39 // pred_region
        %p303 = scmp.lt.s32.totalorder %s15, 1
        %s304 = scalar_select %p303, %s15, 1
        %s305 = smul.addr %s304, 2
        %s306 = smul.addr %s305, 4
        %s307 = scalar_lea.vmem %s3, %s306
      $region44: #{pyramid_pooling.4} parent=39 // pred_fallthru
        _
    $region40: #{pyramid_pooling.4} parent=5 // pred_fallthru
      _
  $region6: #{pyramid_pooling.4} parent=0 // loop_footer
    %s13 = sadd.s32 1, %s9
  $region7: #{pyramid_pooling.4} parent=0 // loop_footer_branch
    %8 = sbr.rel target = $region3
  $region8: #{pyramid_pooling.4} parent=0 // loop_exit
    _

</llo_original>
